<compile_context>
chip_gen: v5e
topology: v5e:2x2
jax: 0.10.0
libtpu: 0.0.40
codegen_flags: <defaults>
</compile_context>

<pallas_src>
import jax
import jax.numpy as jnp
import numpy as np
from jax import lax
from jax.experimental import pallas as pl
from jax.experimental.pallas import tpu as pltpu


def _device_defaults():
    """Pick exp dtype / key tile / VMEM cap from the local TPU generation."""
    kind = ""
    try:
        kind = jax.devices()[0].device_kind.lower()
    except Exception:
        pass
    old_gen = any(t in kind for t in ("v2", "v3", "v4", "v5"))  # no bf16 VPU/EUP
    is_v7 = "v7" in kind
    exp_dtype = jnp.float32 if old_gen else jnp.bfloat16
    default_key_tile = 256 if is_v7 else 512        # v7x: 64 MiB VMEM per core
    vmem_cap = (56 << 20) if is_v7 else (100 << 20)
    return exp_dtype, default_key_tile, vmem_cap


def _make_kernel(C, Cop, Tn, Kt, n_valid, n_pad, exp_dtype):
    """Build the per-(batch, key-tile) kernel body (all sizes are static)."""
    pad = (n_pad != n_valid)
    bf16 = jnp.bfloat16
    f32 = jnp.float32

    def _attend(q_b, k_b, v, mask_ref, kt):
        # logits[n, m] = sum_c k[c, n] * q[c, m]  (contraction depth Cop = 8;
        # zero-padded q/k channel rows contribute exactly 0).  bf16 operands.
        logits = lax.dot_general(k_b, q_b, (((0,), (0,)), ((), ())),
                                 preferred_element_type=f32)        # (Tn, n_pad)
        if pad:
            # Hoisted additive query-column mask (0 valid / -1e30 padded):
            # padded query columns must not affect the softmax normalization.
            logits = logits + mask_ref[...]

        # Exact softmax over the (full, un-tiled) query axis.
        m = jnp.max(logits, axis=-1, keepdims=True)                 # (Tn, 1) f32
        e = jnp.exp((logits - m).astype(exp_dtype))                 # (Tn, n_pad)
        s = jnp.sum(e.astype(f32), axis=-1, keepdims=True)          # (Tn, 1) f32
        inv = pl.reciprocal(s, approx=True)                         # (Tn, 1) f32

        if pad:
            # Padded key rows must not contribute to the output (their x
            # columns are zero-padded, but the value bias is not).
            row = kt * Tn + lax.broadcasted_iota(jnp.int32, (1, Tn), 1)
            v = jnp.where(row < n_valid, v, 0.0)

        # Apply the denominator while casting the weights to bf16 (one fused
        # VPU pass); the value @ attn matmul (the only healthy-K contraction,
        # K = Tn) then runs with bf16 operands on the MXU.
        attn_b = (e * inv.astype(e.dtype)).astype(bf16)             # (Tn, n_pad)
        return jnp.dot(v.astype(bf16), attn_b,
                       preferred_element_type=f32)                  # (C, n_pad)

    if Kt == 1:
        def kernel(xf_ref, mask_ref, w_ref, b_ref, out_ref):
            # xf_ref : (1, C, n_pad) full spatial slab (queries/keys/residual)
            # w_ref  : (R, C) bf16   [Wq_pad ; gamma*Wv ; Wk_pad]
            # b_ref  : (R, 1) f32    matching fused biases
            x_b = xf_ref[0].astype(bf16)
            qvk = (jnp.dot(w_ref[...], x_b, preferred_element_type=f32)
                   + b_ref[...])                                    # (R, n_pad)
            q_b = qvk[:Cop, :].astype(bf16)
            v = qvk[Cop:Cop + C, :]                                 # gamma folded in
            k_b = qvk[Cop + C:, :].astype(bf16)
            out_v = _attend(q_b, k_b, v, mask_ref, 0)
            out_ref[0] = (out_v + xf_ref[0]).astype(out_ref.dtype)
        return kernel

    def kernel(xf_ref, mask_ref, w_ref, b_ref, out_ref, q_scr, acc_scr):
        kt = pl.program_id(1)

        @pl.when(kt == 0)
        def _init():
            # Queries (needed against every key tile): computed once per batch,
            # cached in bf16 (MXU operand dtype, half the scratch footprint).
            x_b = xf_ref[0].astype(bf16)
            q_scr[...] = (jnp.dot(w_ref[:Cop, :], x_b,
                                  preferred_element_type=f32)
                          + b_ref[:Cop, :]).astype(bf16)
            acc_scr[...] = jnp.zeros_like(acc_scr)

        # Current key/value tile sliced from the resident slab (no second DMA).
        start = pl.multiple_of(kt * Tn, Tn)
        xt_b = xf_ref[0, :, pl.ds(start, Tn)].astype(bf16)          # (C, Tn)
        kv = (jnp.dot(w_ref[Cop:, :], xt_b, preferred_element_type=f32)
              + b_ref[Cop:, :])                                     # (C+Cop, Tn)
        v = kv[:C, :]                                               # (C,   Tn)
        k_b = kv[C:, :].astype(bf16)                                # (Cop, Tn)

        acc_scr[...] += _attend(q_scr[...], k_b, v, mask_ref, kt)

        @pl.when(kt == Kt - 1)
        def _finalize():
            out_ref[0] = (acc_scr[...] + xf_ref[0]).astype(out_ref.dtype)

    return kernel


def self_attention_2d(x, wq, bq, wk, bk, wv, bv, gamma, *,
                      key_tile=None, exp_dtype=None):
    """SAGAN SelfAttention2d forward.  x: (B, C, H, W) -> (B, C, H, W)."""
    B, C, H, W = x.shape
    N = H * W
    Co = wq.shape[0]
    Cop = max(8, ((Co + 7) // 8) * 8)          # q/k rows padded to sublane tile
    f32 = jnp.float32
    bf16 = jnp.bfloat16

    d_exp, d_tile, vmem_cap = _device_defaults()
    exp_dtype = d_exp if exp_dtype is None else exp_dtype
    key_tile = d_tile if key_tile is None else key_tile
    key_tile = max(128, (key_tile // 128) * 128)

    # Lane-dense spatial axis: pad N up to a multiple of 128 (and of the key
    # tile when streaming); padded positions are masked inside the kernel.
    n_pad = ((N + 127) // 128) * 128
    if n_pad <= key_tile:
        Tn = n_pad
    else:
        Tn = key_tile
        n_pad = ((N + Tn - 1) // Tn) * Tn
    Kt = n_pad // Tn

    x_flat = x.reshape(B, C, N)
    if n_pad != N:
        x_flat = jnp.pad(x_flat, ((0, 0), (0, 0), (0, n_pad - N)))

    # Hoisted additive query-column mask (0 valid / -1e30 padded), built once.
    col = lax.broadcasted_iota(jnp.int32, (1, n_pad), 1)
    qmask = jnp.where(col < N, 0.0, -1e30).astype(f32)

    # Fused projection weights [Wq_pad ; gamma*Wv ; Wk_pad]; gamma and the
    # Co -> Cop zero-padding are folded in once outside the kernel.  Weights in
    # bf16 (MXU operand dtype); biases stay f32.
    g = jnp.asarray(gamma, f32).reshape(())
    wq_p = jnp.zeros((Cop, C), f32).at[:Co, :].set(wq.astype(f32))
    wk_p = jnp.zeros((Cop, C), f32).at[:Co, :].set(wk.astype(f32))
    bq_p = jnp.zeros((Cop, 1), f32).at[:Co, 0].set(bq.astype(f32))
    bk_p = jnp.zeros((Cop, 1), f32).at[:Co, 0].set(bk.astype(f32))
    w_all = jnp.concatenate([wq_p, g * wv.astype(f32), wk_p], axis=0).astype(bf16)
    b_all = jnp.concatenate([bq_p, (g * bv.astype(f32)).reshape(C, 1), bk_p],
                            axis=0)
    R = 2 * Cop + C

    kernel = _make_kernel(C, Cop, Tn, Kt, N, n_pad, exp_dtype)

    # Explicit scoped-VMEM budget: double-buffered blocks + persistent scratch
    # + per-step intermediates, with headroom (capped per generation).
    xb = x_flat.dtype.itemsize
    ebytes = jnp.dtype(exp_dtype).itemsize
    blocks = 2 * (C * n_pad * xb)                   # resident input slab
    blocks += 2 * (C * n_pad * xb)                  # output slab
    blocks += 2 * (n_pad * 4 + R * C * 2 + R * 4)   # mask + fused W + fused b
    scratch = (Cop * n_pad * 2 + C * n_pad * 4) if Kt > 1 else 0
    interm = Tn * n_pad * (4 + ebytes + 2)          # logits + e + attn_b
    interm += (R * n_pad if Kt == 1 else (C + Cop) * Tn) * 4   # projection out
    interm += (C + Cop) * n_pad * 4                 # residual / q / misc temps
    vmem_limit = int(min(vmem_cap,
                         max(32 << 20,
                             1.5 * (blocks + scratch + interm) + (2 << 20))))

    scratch_shapes = []
    if Kt > 1:
        scratch_shapes = [
            pltpu.VMEM((Cop, n_pad), bf16),         # cached bf16 queries
            pltpu.VMEM((C, n_pad), f32),            # f32 output accumulator
        ]

    out = pl.pallas_call(
        kernel,
        out_shape=jax.ShapeDtypeStruct((B, C, n_pad), x.dtype),
        grid_spec=pltpu.PrefetchScalarGridSpec(
            num_scalar_prefetch=0,
            grid=(B, Kt),                                     # key tiles stream last
            in_specs=[
                pl.BlockSpec((1, C, n_pad), lambda b, k: (b, 0, 0)),  # full slab
                pl.BlockSpec((1, n_pad),    lambda b, k: (0, 0)),     # query mask
                pl.BlockSpec((R, C),        lambda b, k: (0, 0)),     # fused W bf16
                pl.BlockSpec((R, 1),        lambda b, k: (0, 0)),     # fused b f32
            ],
            out_specs=pl.BlockSpec((1, C, n_pad), lambda b, k: (b, 0, 0)),
            scratch_shapes=scratch_shapes,
        ),
        compiler_params=pltpu.CompilerParams(
            dimension_semantics=("parallel", "arbitrary"),
            vmem_limit_bytes=vmem_limit),
    )(x_flat, qmask, w_all, b_all)

    if n_pad != N:
        out = out[:, :, :N]
    return out.reshape(B, C, H, W)


def _reference(x, wq, bq, wk, bk, wv, bv, gamma):
    # Pure-JAX f32 reference mirroring the PyTorch forward exactly.
    B, C, H, W = x.shape
    N = H * W
    xf = x.reshape(B, C, N)
    q = jnp.einsum('oc,bcn->bon', wq, xf) + bq[None, :, None]
    k = jnp.einsum('oc,bcn->bon', wk, xf) + bk[None, :, None]
    v = jnp.einsum('oc,bcn->bon', wv, xf) + bv[None, :, None]
    logits = jnp.einsum('bcn,bcm->bnm', k, q)
    attn = jax.nn.softmax(logits, axis=-1)
    out_v = jnp.einsum('bcn,bnm->bcm', v, attn)
    return (gamma * out_v + xf).reshape(B, C, H, W)


if __name__ == "__main__":
    key = jax.random.PRNGKey(0)
    B, C, H, W = 2, 16, 16, 16          # input_dims=16 -> output_dims = 16 // 8 = 2
    Co = C // 8

    ks = jax.random.split(key, 8)
    x = jax.random.normal(ks[0], (B, C, H, W), jnp.float32)
    wq = jax.random.normal(ks[1], (Co, C), jnp.float32) * 0.1
    bq = jax.random.normal(ks[2], (Co,), jnp.float32) * 0.1
    wk = jax.random.normal(ks[3], (Co, C), jnp.float32) * 0.1
    bk = jax.random.normal(ks[4], (Co,), jnp.float32) * 0.1
    wv = jax.random.normal(ks[5], (C, C), jnp.float32) * 0.1
    bv = jax.random.normal(ks[6], (C,), jnp.float32) * 0.1
    # Module __init__ sets gamma = 0 (output == x); use a nonzero deterministic
    # value so the attention path is actually exercised.
    gamma = jnp.float32(0.5)

    # MXU operands are bf16 (f32 accumulate), exp may run in bf16, and the
    # softmax reciprocal uses the EUP approximation -> compare against the f32
    # reference with bf16-level tolerance.
    TOL = dict(rtol=2e-2, atol=2e-2)

    ref = _reference(x, wq, bq, wk, bk, wv, bv, gamma)

    # 1) main case (single fused step per batch item)
    out = jax.block_until_ready(self_attention_2d(x, wq, bq, wk, bk, wv, bv, gamma))
    np.testing.assert_allclose(np.asarray(out), np.asarray(ref), **TOL)

    # 2) streamed key-tile path (Kt > 1, in-kernel tile slicing), same result
    out_t = jax.block_until_ready(
        self_attention_2d(x, wq, bq, wk, bk, wv, bv, gamma, key_tile=128))
    np.testing.assert_allclose(np.asarray(out_t), np.asarray(ref), **TOL)

    # 3) lane-padding + masking path (N = 144 -> padded to 256)
    x2 = jax.random.normal(ks[7], (B, C, 12, 12), jnp.float32)
    ref2 = _reference(x2, wq, bq, wk, bk, wv, bv, gamma)
    out2 = jax.block_until_ready(self_attention_2d(x2, wq, bq, wk, bk, wv, bv, gamma))
    np.testing.assert_allclose(np.asarray(out2), np.asarray(ref2), **TOL)

    # 4) combined padding + streaming path (masking across key tiles)
    out2_t = jax.block_until_ready(
        self_attention_2d(x2, wq, bq, wk, bk, wv, bv, gamma, key_tile=128))
    np.testing.assert_allclose(np.asarray(out2_t), np.asarray(ref2), **TOL)

    print("KERNEL_OK")
</pallas_src>

<mosaic_0001>
module attributes {stable_mosaic.version = 11 : i64} {
  func.func @kernel(%arg0: i32, %arg1: i32, %arg2: memref<1x16x256xf32, #tpu.memory_space<vmem>>, %arg3: memref<1x256xf32, #tpu.memory_space<vmem>>, %arg4: memref<32x16xbf16, #tpu.memory_space<vmem>>, %arg5: memref<32x1xf32, #tpu.memory_space<vmem>>, %arg6: memref<1x16x256xf32, #tpu.memory_space<vmem>>) attributes {dimension_semantics = [#tpu.dimension_semantics<parallel>, #tpu.dimension_semantics<arbitrary>], iteration_bounds = array<i64: 2, 1>, scalar_prefetch = 0 : i64, scratch_operands = 0 : i64, tpu.core_type = #tpu.core_type<tc>, window_params = [{transform_indices = @transform_0, window_bounds = array<i64: 1, 16, 256>}, {pipeline_mode = #tpu.pipeline_mode<synchronous>, transform_indices = @transform_1, window_bounds = array<i64: 1, 256>}, {pipeline_mode = #tpu.pipeline_mode<synchronous>, transform_indices = @transform_2, window_bounds = array<i64: 32, 16>}, {pipeline_mode = #tpu.pipeline_mode<synchronous>, transform_indices = @transform_3, window_bounds = array<i64: 32, 1>}, {transform_indices = @transform_4, window_bounds = array<i64: 1, 16, 256>}]} {
    %c0 = arith.constant 0 : index
    %c0_0 = arith.constant 0 : index
    %c0_1 = arith.constant 0 : index
    %0 = vector.load %arg2[%c0, %c0_0, %c0_1] : memref<1x16x256xf32, #tpu.memory_space<vmem>>, vector<1x16x256xf32>
    %1 = vector.shape_cast %0 : vector<1x16x256xf32> to vector<16x256xf32>
    %2 = arith.truncf %1 : vector<16x256xf32> to vector<16x256xbf16>
    %c0_2 = arith.constant 0 : index
    %c0_3 = arith.constant 0 : index
    %3 = vector.load %arg4[%c0_2, %c0_3] : memref<32x16xbf16, #tpu.memory_space<vmem>>, vector<32x16xbf16>
    %cst = arith.constant dense<0.000000e+00> : vector<32x256xf32>
    %4 = tpu.matmul %3, %2, %cst {dimension_numbers = #tpu.dot_dimension_numbers<[1], [0], [0], [1], [0, 0, 1, 1], [], []>} : vector<32x16xbf16>, vector<16x256xbf16>, vector<32x256xf32> -> vector<32x256xf32>
    %c0_4 = arith.constant 0 : index
    %c0_5 = arith.constant 0 : index
    %5 = vector.load %arg5[%c0_4, %c0_5] : memref<32x1xf32, #tpu.memory_space<vmem>>, vector<32x1xf32>
    %6 = vector.broadcast %5 : vector<32x1xf32> to vector<32x256xf32>
    %7 = arith.addf %4, %6 : vector<32x256xf32>
    %8 = vector.extract_strided_slice %7 {offsets = [0, 0], sizes = [8, 256], strides = [1, 1]} : vector<32x256xf32> to vector<8x256xf32>
    %9 = arith.truncf %8 : vector<8x256xf32> to vector<8x256xbf16>
    %10 = vector.extract_strided_slice %7 {offsets = [8, 0], sizes = [16, 256], strides = [1, 1]} : vector<32x256xf32> to vector<16x256xf32>
    %11 = vector.extract_strided_slice %7 {offsets = [24, 0], sizes = [8, 256], strides = [1, 1]} : vector<32x256xf32> to vector<8x256xf32>
    %12 = arith.truncf %11 : vector<8x256xf32> to vector<8x256xbf16>
    %cst_6 = arith.constant dense<0.000000e+00> : vector<256x256xf32>
    %13 = tpu.matmul %12, %9, %cst_6 {dimension_numbers = #tpu.dot_dimension_numbers<[0], [0], [1], [1], [0, 1, 1, 1], [], []>} : vector<8x256xbf16>, vector<8x256xbf16>, vector<256x256xf32> -> vector<256x256xf32>
    %cst_7 = arith.constant dense<0xFF800000> : vector<256xf32>
    %14 = vector.multi_reduction <maximumf>, %13, %cst_7 [1] : vector<256x256xf32> to vector<256xf32>
    %15 = vector.shape_cast %14 : vector<256xf32> to vector<256x1xf32>
    %16 = vector.broadcast %15 : vector<256x1xf32> to vector<256x256xf32>
    %17 = arith.subf %13, %16 : vector<256x256xf32>
    %18 = arith.truncf %17 : vector<256x256xf32> to vector<256x256xbf16>
    %19 = math.exp %18 : vector<256x256xbf16>
    %20 = arith.extf %19 : vector<256x256xbf16> to vector<256x256xf32>
    %cst_8 = arith.constant dense<0.000000e+00> : vector<256xf32>
    %21 = vector.multi_reduction <add>, %20, %cst_8 [1] : vector<256x256xf32> to vector<256xf32>
    %22 = vector.shape_cast %21 : vector<256xf32> to vector<256x1xf32>
    %23 = tpu.reciprocal %22 {approx = true} : vector<256x1xf32> -> vector<256x1xf32>
    %24 = arith.truncf %23 : vector<256x1xf32> to vector<256x1xbf16>
    %25 = vector.broadcast %24 : vector<256x1xbf16> to vector<256x256xbf16>
    %26 = arith.mulf %19, %25 : vector<256x256xbf16>
    %27 = arith.truncf %10 : vector<16x256xf32> to vector<16x256xbf16>
    %cst_9 = arith.constant dense<0.000000e+00> : vector<16x256xf32>
    %28 = tpu.matmul %27, %26, %cst_9 {dimension_numbers = #tpu.dot_dimension_numbers<[1], [0], [0], [1], [0, 0, 1, 1], [], []>} : vector<16x256xbf16>, vector<256x256xbf16>, vector<16x256xf32> -> vector<16x256xf32>
    %c0_10 = arith.constant 0 : index
    %c0_11 = arith.constant 0 : index
    %c0_12 = arith.constant 0 : index
    %29 = vector.load %arg2[%c0_10, %c0_11, %c0_12] : memref<1x16x256xf32, #tpu.memory_space<vmem>>, vector<1x16x256xf32>
    %30 = vector.shape_cast %29 : vector<1x16x256xf32> to vector<16x256xf32>
    %31 = arith.addf %28, %30 : vector<16x256xf32>
    %c0_13 = arith.constant 0 : index
    %c0_14 = arith.constant 0 : index
    %c0_15 = arith.constant 0 : index
    %32 = vector.load %arg6[%c0_13, %c0_14, %c0_15] : memref<1x16x256xf32, #tpu.memory_space<vmem>>, vector<1x16x256xf32>
    %33 = vector.shape_cast %32 : vector<1x16x256xf32> to vector<16x256xf32>
    %34 = vector.shape_cast %31 : vector<16x256xf32> to vector<1x16x256xf32>
    tpu.vector_store %arg6[%c0_13, %c0_14, %c0_15], %34 {strides = array<i32>} : memref<1x16x256xf32, #tpu.memory_space<vmem>>, vector<1x16x256xf32>,
    return
  }
  func.func @transform_0(%arg0: i32, %arg1: i32) -> (i32, i32, i32) {
    %c0_i32 = arith.constant 0 : i32
    %c0_i32_0 = arith.constant 0 : i32
    %c0_i32_1 = arith.constant 0 : i32
    return %arg0, %c0_i32, %c0_i32_0 : i32, i32, i32
  }
  func.func @transform_1(%arg0: i32, %arg1: i32) -> (i32, i32) {
    %c0_i32 = arith.constant 0 : i32
    %c0_i32_0 = arith.constant 0 : i32
    %c0_i32_1 = arith.constant 0 : i32
    return %c0_i32, %c0_i32_0 : i32, i32
  }
  func.func @transform_2(%arg0: i32, %arg1: i32) -> (i32, i32) {
    %c0_i32 = arith.constant 0 : i32
    %c0_i32_0 = arith.constant 0 : i32
    %c0_i32_1 = arith.constant 0 : i32
    return %c0_i32, %c0_i32_0 : i32, i32
  }
  func.func @transform_3(%arg0: i32, %arg1: i32) -> (i32, i32) {
    %c0_i32 = arith.constant 0 : i32
    %c0_i32_0 = arith.constant 0 : i32
    %c0_i32_1 = arith.constant 0 : i32
    return %c0_i32, %c0_i32_0 : i32, i32
  }
  func.func @transform_4(%arg0: i32, %arg1: i32) -> (i32, i32, i32) {
    %c0_i32 = arith.constant 0 : i32
    %c0_i32_0 = arith.constant 0 : i32
    %c0_i32_1 = arith.constant 0 : i32
    return %arg0, %c0_i32, %c0_i32_0 : i32, i32, i32
  }
}

</mosaic_0001>

<llo_original>
// kernel: tpu_custom_call.1
$region0: #{tpu_custom_call.1}
  #allocation0 [shape = 'u32[]', space=smem, size = 0x4, offset = 0x4, fixed_abs, tag = 'smem constant byte address 0x4 - core index']
  #allocation1 [shape = 'u32[72,128]{1,0:T(1,128)}', space=vmem, size = 0x9000, scoped, tag = 'internal scratch']
  %s0 = inlined_call_operand.hbm [shape: f32[2,16,256], index: 0, kind: input, shape index: {}]
  %s1 = inlined_call_operand.vmem [shape: f32[1,256], index: 1, kind: input, shape index: {}]
  %s2 = inlined_call_operand.vmem [shape: bf16[32,16], index: 2, kind: input, shape index: {}]
  %s3 = inlined_call_operand.vmem [shape: f32[32,1], index: 3, kind: input, shape index: {}]
  %s4 = inlined_call_operand.hbm [shape: f32[2,16,256], index: 4, kind: output, shape index: {}]
  %s5 = sld [smem:[#allocation0]]
  $region53: #{tpu_custom_call.1} parent=0
    _
  %s7 = ssub.s32 1, %s5
  %s8 = scalar_select 0, %s7, %s5
  $region1: #{tpu_custom_call.1} parent=0
    #allocation2 [shape = 'u8[32768]{0}', space=vmem, size = 0x8000, scoped, tag = 'input window, operand 0']
    #allocation3 [shape = 's32[2]{0}', space=sflag, size = 0x8, scoped, tag = 'scoped memory for tpu_custom_call.1']
    #allocation4 [shape = 's32[2]{0}', space=sflag, size = 0x8, scoped, tag = 'scoped memory for tpu_custom_call.1']
    #allocation5 [shape = 'u8[32768]{0}', space=vmem, size = 0x8000, scoped, tag = 'output window, operand 0']
    %9 = vsyncpa [#allocation3], 0
    %s10 = scalar_lea.sflag [#allocation3], 1
    %11 = vsyncpa %s10, 0
    %12 = vsyncpa [#allocation4], 0
    %s13 = scalar_lea.sflag [#allocation4], 1
    %14 = vsyncpa %s13, 0
    loop: start=0, step=1, limit=4
    $region2: #{tpu_custom_call.1} parent=1 // loop_pre_header
      _
    $region3: #{tpu_custom_call.1} parent=1 // loop_header
      %s16 = sphi 0, %s20
      %p17 = scmp.ge.s32.totalorder %s16, 4
      %s23 = sphi 0, %s35
      %s24 = sphi 0, %s31
      %s25 = sphi 0, %s23
      %s26 = sphi 0, %s24
      %s27 = sphi 0, %s25
      %s28 = sphi 0, %s26
      %s38 = sphi 0, %s40
      %s41 = sphi 0, %s38
      %s42 = sphi 0, %s41
      %s58 = sphi 0, %s42
      %s62 = sphi 0, %s62
      %s64 = sphi 0, %s62
      %s65 = sphi 0, %s64
      %s79 = sphi 0, %s65
      %s83 = sphi 0, %s83
      %s85 = sphi 0, %s83
      %s86 = sphi 0, %s85
      %s100 = sphi 0, %s86
      %s104 = sphi 0, %s104
      %s106 = sphi 0, %s104
      %s107 = sphi 0, %s106
      %s121 = sphi 0, %s107
      %s127 = sphi 0, %s129
      %s130 = sphi 0, %s127
      %s131 = sphi 0, %s130
      %s147 = sphi 0, %s131
    $region4: #{tpu_custom_call.1} parent=1 // loop_header_branch
      %19 = sbr.rel (%p17) target = $region8
    $region5: #{tpu_custom_call.1} parent=1 // loop_body
      %s21 = ssub.s32 %s16, 1
      %s22 = ssub.s32 %s16, 2
      %s29 = sadd.s32 1, %s24
      %p30 = scmp.ge.s32.totalorder %s29, 1
      %s31 = scalar_select %p30, 0, %s29
      %s32 = sadd.s32 1, %s23
      %s33 = scalar_select %p30, %s32, %s23
      %p34 = scmp.ge.s32.totalorder %s33, 2
      %s35 = scalar_select %p34, 0, %s33
      %s36 = ssub.s32 %s23, %s35
      %p37 = scmp.eq.s32.totalorder %s36, 0
      %s39 = sadd.s32 %s38, 1
      %s40 = scalar_select %p37, %s38, %s39
      %p43 = pneg %p37
      %p44 = scmp.eq.s32.totalorder %s16, 1
      %p45 = por %p43, %p44
      %p46 = scmp.ne.s32.totalorder %s38, %s41
      %p47 = scmp.eq.s32.totalorder %s16, 0
      %p48 = por %p46, %p47
      %p49 = scmp.ne.s32.totalorder %s38, %s41
      %p50 = scmp.eq.s32.totalorder %s21, 1
      %p51 = por %p49, %p50
      %p52 = scmp.ne.s32.totalorder %s41, %s42
      %p53 = scmp.eq.s32.totalorder %s21, 0
      %p54 = por %p52, %p53
      %p55 = scmp.ne.s32.totalorder %s41, %s42
      %p56 = scmp.eq.s32.totalorder %s22, 1
      %p57 = por %p55, %p56
      %p59 = scmp.ne.s32.totalorder %s42, %s58
      %p60 = scmp.eq.s32.totalorder %s22, 0
      %p61 = por %p59, %p60
      %s63 = sadd.s32 %s62, 1
      %p66 = scmp.eq.s32.totalorder %s16, 1
      %p67 = scmp.ne.s32.totalorder %s62, %s64
      %p68 = scmp.eq.s32.totalorder %s16, 0
      %p69 = por %p67, %p68
      %p70 = scmp.ne.s32.totalorder %s62, %s64
      %p71 = scmp.eq.s32.totalorder %s21, 1
      %p72 = por %p70, %p71
      %p73 = scmp.ne.s32.totalorder %s64, %s65
      %p74 = scmp.eq.s32.totalorder %s21, 0
      %p75 = por %p73, %p74
      %p76 = scmp.ne.s32.totalorder %s64, %s65
      %p77 = scmp.eq.s32.totalorder %s22, 1
      %p78 = por %p76, %p77
      %p80 = scmp.ne.s32.totalorder %s65, %s79
      %p81 = scmp.eq.s32.totalorder %s22, 0
      %p82 = por %p80, %p81
      %s84 = sadd.s32 %s83, 1
      %p87 = scmp.eq.s32.totalorder %s16, 1
      %p88 = scmp.ne.s32.totalorder %s83, %s85
      %p89 = scmp.eq.s32.totalorder %s16, 0
      %p90 = por %p88, %p89
      %p91 = scmp.ne.s32.totalorder %s83, %s85
      %p92 = scmp.eq.s32.totalorder %s21, 1
      %p93 = por %p91, %p92
      %p94 = scmp.ne.s32.totalorder %s85, %s86
      %p95 = scmp.eq.s32.totalorder %s21, 0
      %p96 = por %p94, %p95
      %p97 = scmp.ne.s32.totalorder %s85, %s86
      %p98 = scmp.eq.s32.totalorder %s22, 1
      %p99 = por %p97, %p98
      %p101 = scmp.ne.s32.totalorder %s86, %s100
      %p102 = scmp.eq.s32.totalorder %s22, 0
      %p103 = por %p101, %p102
      %s105 = sadd.s32 %s104, 1
      %p108 = scmp.eq.s32.totalorder %s16, 1
      %p109 = scmp.ne.s32.totalorder %s104, %s106
      %p110 = scmp.eq.s32.totalorder %s16, 0
      %p111 = por %p109, %p110
      %p112 = scmp.ne.s32.totalorder %s104, %s106
      %p113 = scmp.eq.s32.totalorder %s21, 1
      %p114 = por %p112, %p113
      %p115 = scmp.ne.s32.totalorder %s106, %s107
      %p116 = scmp.eq.s32.totalorder %s21, 0
      %p117 = por %p115, %p116
      %p118 = scmp.ne.s32.totalorder %s106, %s107
      %p119 = scmp.eq.s32.totalorder %s22, 1
      %p120 = por %p118, %p119
      %p122 = scmp.ne.s32.totalorder %s107, %s121
      %p123 = scmp.eq.s32.totalorder %s22, 0
      %p124 = por %p122, %p123
      %s125 = ssub.s32 %s23, %s35
      %p126 = scmp.eq.s32.totalorder %s125, 0
      %s128 = sadd.s32 %s127, 1
      %s129 = scalar_select %p126, %s127, %s128
      %p132 = pneg %p126
      %p133 = scmp.eq.s32.totalorder %s16, 1
      %p134 = por %p132, %p133
      %p135 = scmp.ne.s32.totalorder %s127, %s130
      %p136 = scmp.eq.s32.totalorder %s16, 0
      %p137 = por %p135, %p136
      %p138 = scmp.ne.s32.totalorder %s127, %s130
      %p139 = scmp.eq.s32.totalorder %s21, 1
      %p140 = por %p138, %p139
      %p141 = scmp.ne.s32.totalorder %s130, %s131
      %p142 = scmp.eq.s32.totalorder %s21, 0
      %p143 = por %p141, %p142
      %p144 = scmp.ne.s32.totalorder %s130, %s131
      %p145 = scmp.eq.s32.totalorder %s22, 1
      %p146 = por %p144, %p145
      %p148 = scmp.ne.s32.totalorder %s131, %s147
      %p149 = scmp.eq.s32.totalorder %s22, 0
      %p150 = por %p148, %p149
      %p151 = scmp.le.s32.totalorder 1, %s16
      %p152 = scmp.lt.s32.totalorder %s16, 3
      %p153 = pnand %p151, %p152
      %p154 = pneg %p153
      // Predicated region
      $region9: #{tpu_custom_call.1} parent=5 // pred_check
        _
      $region10: #{tpu_custom_call.1} parent=5 // pred_check_branch
        %156 = sbr.rel (%p153) target = $region12
      $region11: #{tpu_custom_call.1} parent=5 // pred_region
        %s157 = ssub.s32 %s16, 1
        // Predicated region
        $region13: #{tpu_custom_call.1} parent=11 // pred_check
          %p158 = pneg %p75
        $region14: #{tpu_custom_call.1} parent=11 // pred_check_branch
          %160 = sbr.rel (%p158) target = $region16
        $region15: #{tpu_custom_call.1} parent=11 // pred_region
          _
        $region16: #{tpu_custom_call.1} parent=11 // pred_fallthru
          _
        // Predicated region
        $region17: #{tpu_custom_call.1} parent=11 // pred_check
          %p161 = pneg %p96
        $region18: #{tpu_custom_call.1} parent=11 // pred_check_branch
          %163 = sbr.rel (%p161) target = $region20
        $region19: #{tpu_custom_call.1} parent=11 // pred_region
          _
        $region20: #{tpu_custom_call.1} parent=11 // pred_fallthru
          _
        // Predicated region
        $region21: #{tpu_custom_call.1} parent=11 // pred_check
          %p164 = pneg %p117
        $region22: #{tpu_custom_call.1} parent=11 // pred_check_branch
          %166 = sbr.rel (%p164) target = $region24
        $region23: #{tpu_custom_call.1} parent=11 // pred_region
          _
        $region24: #{tpu_custom_call.1} parent=11 // pred_fallthru
          _
      $region12: #{tpu_custom_call.1} parent=5 // pred_fallthru
        _
      %p167 = scmp.lt.s32.totalorder %s16, 2
      // Predicated region
      $region25: #{tpu_custom_call.1} parent=5 // pred_check
        %p168 = pneg %p167
      $region26: #{tpu_custom_call.1} parent=5 // pred_check_branch
        %170 = sbr.rel (%p168) target = $region28
      $region27: #{tpu_custom_call.1} parent=5 // pred_region
        // Predicated region
        $region29: #{tpu_custom_call.1} parent=27 // pred_check
          %p171 = pneg %p48
        $region30: #{tpu_custom_call.1} parent=27 // pred_check_branch
          %173 = sbr.rel (%p171) target = $region32
        $region31: #{tpu_custom_call.1} parent=27 // pred_region
          %s174 = sand.u32 %s38, 1
          %s175 = scalar_lea.sflag [#allocation3], %s174
          %s176 = sand.u32 %s38, 1
          %s177 = smul.addr %s176, 32
          %s178 = scalar_lea.vmem [#allocation2], %s177
          %180 = vsyncadd %s175, 0
          %s181 = smul.addr %s23, 4
          %s182 = smul.addr %s181, 8
          %s183 = scalar_lea.hbm %s0, %s182
          %s184 = sshll.u32 %s183, 4
          %s185 = int_to_ptr.hbm [resolvable:$true] %s184
          %s186 = sshll.u32 %s178, 4
          %s187 = int_to_ptr.vmem [resolvable:$true] %s186
          %192 = dma.hbm_to_vmem [thread:$0]  %s185, 512, %s187, %s175, 256, 256, 16
        $region32: #{tpu_custom_call.1} parent=27 // pred_fallthru
          _
      $region28: #{tpu_custom_call.1} parent=5 // pred_fallthru
        _
      %p193 = scmp.le.s32.totalorder 1, %s16
      %p194 = scmp.lt.s32.totalorder %s16, 3
      %p195 = pnand %p193, %p194
      %p196 = pneg %p195
      // Predicated region
      $region33: #{tpu_custom_call.1} parent=5 // pred_check
        _
      $region34: #{tpu_custom_call.1} parent=5 // pred_check_branch
        %198 = sbr.rel (%p195) target = $region36
      $region35: #{tpu_custom_call.1} parent=5 // pred_region
        %s199 = ssub.s32 %s16, 1
        %s200 = sand.u32 %s41, 1
        %s201 = scalar_lea.sflag [#allocation3], %s200
        %s202 = sand.u32 %s41, 1
        %s203 = smul.addr %s202, 32
        %s204 = scalar_lea.vmem [#allocation2], %s203
        // Predicated region
        $region37: #{tpu_custom_call.1} parent=35 // pred_check
          %p205 = pneg %p54
        $region38: #{tpu_custom_call.1} parent=35 // pred_check_branch
          %207 = sbr.rel (%p205) target = $region40
        $region39: #{tpu_custom_call.1} parent=35 // pred_region
          %209 = dma.done %s201, 512
        $region40: #{tpu_custom_call.1} parent=35 // pred_fallthru
          _
        %s210 = sand.u32 %s41, 1
        %s211 = scalar_lea.sflag [#allocation3], %s210
        %s212 = sand.u32 %s41, 1
        %s213 = smul.addr %s212, 32
        %s214 = scalar_lea.vmem [#allocation2], %s213
        %p215 = pneg %p54
        %p216 = pneg %p51
        %p217 = pneg %p75
        %p218 = pneg %p72
        %p219 = pneg %p96
        %p220 = pneg %p93
        %p221 = pneg %p117
        %p222 = pneg %p114
        %p223 = pneg %p143
        %p224 = pneg %p140
        %s225 = sand.u32 %s130, 1
        %s226 = scalar_lea.sflag [#allocation4], %s225
        %s227 = sand.u32 %s130, 1
        %s228 = smul.addr %s227, 32
        %s229 = scalar_lea.vmem [#allocation5], %s228
        %v231 = vld [vmem:[%s204] sm:$0xff]
        %v232 = vld [vmem:[%s204 + $0x8] sm:$0xff]
        %v233 = vld [vmem:[%s204 + $0x10] sm:$0xff]
        %v234 = vld [vmem:[%s204 + $0x18] sm:$0xff]
        %v235 = vpack.c.bf16 %v233, %v231
        %v236 = vpack.c.bf16 %v234, %v232
        %v237 = vld [vmem:[%s2] sm:$0xf]
        %v238 = vld [vmem:[%s2 + $0x4] sm:$0xf]
        %v239 = vld [vmem:[%s2 + $0x8] sm:$0xf]
        %v240 = vld [vmem:[%s2 + $0xc] sm:$0xf]
        %v241 = vld [vmem:[%s3] sm:$0xff]
        %v242 = vld [vmem:[%s3 + $0x8] sm:$0xff]
        %v243 = vld [vmem:[%s3 + $0x10] sm:$0xff]
        %v244 = vld [vmem:[%s3 + $0x18] sm:$0xff]
        %246 = vset.pattern.permute.xlu0 0
        %247 = vperm.xlu0 %246, %v241
        %v248 = vpop.permute.xlu0 %247
        %251 = vset.pattern.permute.xlu0 0
        %252 = vperm.xlu0 %251, %v242
        %v253 = vpop.permute.xlu0 %252
        %256 = vset.pattern.permute.xlu0 0
        %257 = vperm.xlu0 %256, %v243
        %v258 = vpop.permute.xlu0 %257
        %261 = vset.pattern.permute.xlu0 0
        %262 = vperm.xlu0 %261, %v244
        %v263 = vpop.permute.xlu0 %262
        %v269 = vunpack.c.l.b16 %v237
        %v270 = vunpack.c.l.b16 %v238
        %v271 = vunpack.c.l.b16 %v239
        %v272 = vunpack.c.l.b16 %v240
        %v273 = vpack.c.b16 %v270, %v269
        %v274 = vpack.c.b16 %v272, %v271
        %vm275 = vcmask 130048
        %v277 = vsel %vm275, %v273, 0
        %v280 = vsel %vm275, %v274, 0
        %282 = vmatpush.bf16.msra.mxu0 0
        %283 = vmatpush.bf16.msra.mxu0 0
        %284 = vmatpush.bf16.msra.mxu0 0
        %285 = vmatpush.bf16.msra.mxu0 0
        %286 = vmatpush.bf16.msra.mxu0 0
        %287 = vmatpush.bf16.msra.mxu0 0
        %288 = vmatpush.bf16.msra.mxu0 0
        %289 = vmatpush.bf16.msra.mxu0 %v235
        %290 = vmatmul.bf16.gmra.mxu0 %v277
        %v291 = vpop.f32.mrf.mxu0
        %v292 = vadd.f32 %v248, %v291
        %v293 = vpop.f32.mrf.mxu0
        %v294 = vadd.f32 %v253, %v293
        %295 = vmatmul.bf16.gmra.mxu0 %v280
        %v296 = vpop.f32.mrf.mxu0
        %v297 = vadd.f32 %v258, %v296
        %v298 = vpop.f32.mrf.mxu0
        %v299 = vadd.f32 %v263, %v298
        %300 = vdwg.mxu0
        %301 = vmatpush.bf16.msra.mxu0 0
        %302 = vmatpush.bf16.msra.mxu0 0
        %303 = vmatpush.bf16.msra.mxu0 0
        %304 = vmatpush.bf16.msra.mxu0 0
        %305 = vmatpush.bf16.msra.mxu0 0
        %306 = vmatpush.bf16.msra.mxu0 0
        %307 = vmatpush.bf16.msra.mxu0 0
        %308 = vmatpush.bf16.msra.mxu0 %v236
        %309 = vmatmul.bf16.gmra.mxu0 %v277
        %v310 = vpop.f32.mrf.mxu0
        %v311 = vadd.f32 %v248, %v310
        %v312 = vpop.f32.mrf.mxu0
        %v313 = vadd.f32 %v253, %v312
        %314 = vmatmul.bf16.gmra.mxu0 %v280
        %v315 = vpop.f32.mrf.mxu0
        %v316 = vadd.f32 %v258, %v315
        %v317 = vpop.f32.mrf.mxu0
        %v318 = vadd.f32 %v263, %v317
        %319 = vdwg.mxu0
        %v320 = vpack.c.bf16 %v292, %v292
        %v321 = vpack.c.bf16 %v311, %v311
        %v322 = vpack.c.bf16 %v299, %v299
        %v323 = vpack.c.bf16 %v318, %v318
        %324 = vxpose.binary.xlu0.c.b16.start [1/16] %v323, %v322, 128
        %325 = vxpose.binary.xlu0.c.b16.cont [2/16] 0, 0, 128
        %326 = vxpose.binary.xlu0.c.b16.cont [3/16] 0, 0, 128
        %327 = vxpose.binary.xlu0.c.b16.cont [4/16] 0, 0, 128
        %328 = vxpose.binary.xlu0.c.b16.cont [5/16] 0, 0, 128
        %329 = vxpose.binary.xlu0.c.b16.cont [6/16] 0, 0, 128
        %330 = vxpose.binary.xlu0.c.b16.cont [7/16] 0, 0, 128
        %331 = vxpose.binary.xlu0.c.b16.end [8/16] 0, 0, 128
        %v332 = vpop.trf.xlu0
        %v333 = vpop.trf.xlu0
        %v334 = vpop.trf.xlu0
        %v335 = vpop.trf.xlu0
        %v336 = vpop.trf.xlu0
        %v337 = vpop.trf.xlu0
        %v338 = vpop.trf.xlu0
        %v339 = vpop.trf.xlu0
        %v340 = vpop.trf.xlu0
        %v341 = vpop.trf.xlu0
        %v342 = vpop.trf.xlu0
        %v343 = vpop.trf.xlu0
        %v344 = vpop.trf.xlu0
        %v345 = vpop.trf.xlu0
        %v346 = vpop.trf.xlu0
        %v347 = vpop.trf.xlu0
        %vm348 = vcmask 64512
        %v350 = vsel %vm348, %v332, 0
        %v353 = vsel %vm348, %v334, 0
        %v356 = vsel %vm348, %v336, 0
        %v359 = vsel %vm348, %v338, 0
        %v362 = vsel %vm348, %v340, 0
        %v365 = vsel %vm348, %v342, 0
        %v368 = vsel %vm348, %v344, 0
        %v371 = vsel %vm348, %v346, 0
        %v374 = vsel %vm348, %v333, 0
        %v377 = vsel %vm348, %v335, 0
        %v380 = vsel %vm348, %v337, 0
        %v383 = vsel %vm348, %v339, 0
        %v386 = vsel %vm348, %v341, 0
        %v389 = vsel %vm348, %v343, 0
        %v392 = vsel %vm348, %v345, 0
        %v395 = vsel %vm348, %v347, 0
        %vm397 = vcmask 1043456
        %v399 = vsel %vm397, %v320, 0
        %v402 = vsel %vm397, %v321, 0
        %404 = vmatpush.bf16.msra.mxu0 0
        %405 = vmatpush.bf16.msra.mxu0 0
        %406 = vmatpush.bf16.msra.mxu0 0
        %407 = vmatpush.bf16.msra.mxu0 0
        %408 = vmatpush.bf16.msra.mxu0 0
        %409 = vmatpush.bf16.msra.mxu0 0
        %410 = vmatpush.bf16.msra.mxu0 0
        %411 = vmatpush.bf16.msra.mxu0 %v399
        %412 = vmatmul.bf16.gmra.mxu0 %v350
        %v413 = vpop.f32.mrf.mxu0
        %v414 = vadd.f32 0.0, %v413
        %v415 = vpop.f32.mrf.mxu0
        %v416 = vadd.f32 0.0, %v415
        %417 = vmatmul.bf16.gmra.mxu0 %v353
        %v418 = vpop.f32.mrf.mxu0
        %v419 = vadd.f32 0.0, %v418
        %v420 = vpop.f32.mrf.mxu0
        %v421 = vadd.f32 0.0, %v420
        %422 = vmatmul.bf16.gmra.mxu0 %v356
        %v423 = vpop.f32.mrf.mxu0
        %v424 = vadd.f32 0.0, %v423
        %v425 = vpop.f32.mrf.mxu0
        %v426 = vadd.f32 0.0, %v425
        %427 = vmatmul.bf16.gmra.mxu0 %v359
        %v428 = vpop.f32.mrf.mxu0
        %v429 = vadd.f32 0.0, %v428
        %v430 = vpop.f32.mrf.mxu0
        %v431 = vadd.f32 0.0, %v430
        %432 = vmatmul.bf16.gmra.mxu0 %v362
        %v433 = vpop.f32.mrf.mxu0
        %v434 = vadd.f32 0.0, %v433
        %v435 = vpop.f32.mrf.mxu0
        %v436 = vadd.f32 0.0, %v435
        %437 = vmatmul.bf16.gmra.mxu0 %v365
        %v438 = vpop.f32.mrf.mxu0
        %v439 = vadd.f32 0.0, %v438
        %v440 = vpop.f32.mrf.mxu0
        %v441 = vadd.f32 0.0, %v440
        %442 = vmatmul.bf16.gmra.mxu0 %v368
        %v443 = vpop.f32.mrf.mxu0
        %v444 = vadd.f32 0.0, %v443
        %v445 = vpop.f32.mrf.mxu0
        %v446 = vadd.f32 0.0, %v445
        %447 = vmatmul.bf16.gmra.mxu0 %v371
        %v448 = vpop.f32.mrf.mxu0
        %v449 = vadd.f32 0.0, %v448
        %v450 = vpop.f32.mrf.mxu0
        %v451 = vadd.f32 0.0, %v450
        %452 = vmatmul.bf16.gmra.mxu0 %v374
        %v453 = vpop.f32.mrf.mxu0
        %v454 = vadd.f32 0.0, %v453
        %v455 = vpop.f32.mrf.mxu0
        %v456 = vadd.f32 0.0, %v455
        %457 = vmatmul.bf16.gmra.mxu0 %v377
        %v458 = vpop.f32.mrf.mxu0
        %v459 = vadd.f32 0.0, %v458
        %v460 = vpop.f32.mrf.mxu0
        %v461 = vadd.f32 0.0, %v460
        %462 = vmatmul.bf16.gmra.mxu0 %v380
        %v463 = vpop.f32.mrf.mxu0
        %v464 = vadd.f32 0.0, %v463
        %v465 = vpop.f32.mrf.mxu0
        %v466 = vadd.f32 0.0, %v465
        %467 = vmatmul.bf16.gmra.mxu0 %v383
        %v468 = vpop.f32.mrf.mxu0
        %v469 = vadd.f32 0.0, %v468
        %v470 = vpop.f32.mrf.mxu0
        %v471 = vadd.f32 0.0, %v470
        %472 = vmatmul.bf16.gmra.mxu0 %v386
        %v473 = vpop.f32.mrf.mxu0
        %v474 = vadd.f32 0.0, %v473
        %v475 = vpop.f32.mrf.mxu0
        %v476 = vadd.f32 0.0, %v475
        %477 = vmatmul.bf16.gmra.mxu0 %v389
        %v478 = vpop.f32.mrf.mxu0
        %v479 = vadd.f32 0.0, %v478
        %v480 = vpop.f32.mrf.mxu0
        %v481 = vadd.f32 0.0, %v480
        %482 = vmatmul.bf16.gmra.mxu0 %v392
        %v483 = vpop.f32.mrf.mxu0
        %v484 = vadd.f32 0.0, %v483
        %v485 = vpop.f32.mrf.mxu0
        %v486 = vadd.f32 0.0, %v485
        %487 = vmatmul.bf16.gmra.mxu0 %v395
        %v488 = vpop.f32.mrf.mxu0
        %v489 = vadd.f32 0.0, %v488
        %v490 = vpop.f32.mrf.mxu0
        %v491 = vadd.f32 0.0, %v490
        %492 = vdwg.mxu0
        %493 = vmatpush.bf16.msra.mxu0 0
        %494 = vmatpush.bf16.msra.mxu0 0
        %495 = vmatpush.bf16.msra.mxu0 0
        %496 = vmatpush.bf16.msra.mxu0 0
        %497 = vmatpush.bf16.msra.mxu0 0
        %498 = vmatpush.bf16.msra.mxu0 0
        %499 = vmatpush.bf16.msra.mxu0 0
        %500 = vmatpush.bf16.msra.mxu0 %v402
        %501 = vmatmul.bf16.gmra.mxu0 %v350
        %v502 = vpop.f32.mrf.mxu0
        %v503 = vadd.f32 0.0, %v502
        %v504 = vpop.f32.mrf.mxu0
        %v505 = vadd.f32 0.0, %v504
        %506 = vmatmul.bf16.gmra.mxu0 %v353
        %v507 = vpop.f32.mrf.mxu0
        %v508 = vadd.f32 0.0, %v507
        %v509 = vpop.f32.mrf.mxu0
        %v510 = vadd.f32 0.0, %v509
        %511 = vmatmul.bf16.gmra.mxu0 %v356
        %v512 = vpop.f32.mrf.mxu0
        %v513 = vadd.f32 0.0, %v512
        %v514 = vpop.f32.mrf.mxu0
        %v515 = vadd.f32 0.0, %v514
        %516 = vmatmul.bf16.gmra.mxu0 %v359
        %v517 = vpop.f32.mrf.mxu0
        %v518 = vadd.f32 0.0, %v517
        %v519 = vpop.f32.mrf.mxu0
        %v520 = vadd.f32 0.0, %v519
        %521 = vmatmul.bf16.gmra.mxu0 %v362
        %v522 = vpop.f32.mrf.mxu0
        %v523 = vadd.f32 0.0, %v522
        %v524 = vpop.f32.mrf.mxu0
        %v525 = vadd.f32 0.0, %v524
        %526 = vmatmul.bf16.gmra.mxu0 %v365
        %v527 = vpop.f32.mrf.mxu0
        %v528 = vadd.f32 0.0, %v527
        %v529 = vpop.f32.mrf.mxu0
        %v530 = vadd.f32 0.0, %v529
        %531 = vmatmul.bf16.gmra.mxu0 %v368
        %v532 = vpop.f32.mrf.mxu0
        %v533 = vadd.f32 0.0, %v532
        %v534 = vpop.f32.mrf.mxu0
        %v535 = vadd.f32 0.0, %v534
        %536 = vmatmul.bf16.gmra.mxu0 %v371
        %v537 = vpop.f32.mrf.mxu0
        %v538 = vadd.f32 0.0, %v537
        %v539 = vpop.f32.mrf.mxu0
        %v540 = vadd.f32 0.0, %v539
        %541 = vmatmul.bf16.gmra.mxu0 %v374
        %v542 = vpop.f32.mrf.mxu0
        %v543 = vadd.f32 0.0, %v542
        %v544 = vpop.f32.mrf.mxu0
        %v545 = vadd.f32 0.0, %v544
        %546 = vmatmul.bf16.gmra.mxu0 %v377
        %v547 = vpop.f32.mrf.mxu0
        %v548 = vadd.f32 0.0, %v547
        %v549 = vpop.f32.mrf.mxu0
        %v550 = vadd.f32 0.0, %v549
        %551 = vmatmul.bf16.gmra.mxu0 %v380
        %v552 = vpop.f32.mrf.mxu0
        %v553 = vadd.f32 0.0, %v552
        %v554 = vpop.f32.mrf.mxu0
        %v555 = vadd.f32 0.0, %v554
        %556 = vmatmul.bf16.gmra.mxu0 %v383
        %v557 = vpop.f32.mrf.mxu0
        %v558 = vadd.f32 0.0, %v557
        %v559 = vpop.f32.mrf.mxu0
        %v560 = vadd.f32 0.0, %v559
        %561 = vmatmul.bf16.gmra.mxu0 %v386
        %v562 = vpop.f32.mrf.mxu0
        %v563 = vadd.f32 0.0, %v562
        %v564 = vpop.f32.mrf.mxu0
        %v565 = vadd.f32 0.0, %v564
        %566 = vmatmul.bf16.gmra.mxu0 %v389
        %v567 = vpop.f32.mrf.mxu0
        %v568 = vadd.f32 0.0, %v567
        %v569 = vpop.f32.mrf.mxu0
        %v570 = vadd.f32 0.0, %v569
        %571 = vmatmul.bf16.gmra.mxu0 %v392
        %v572 = vpop.f32.mrf.mxu0
        %v573 = vadd.f32 0.0, %v572
        %v574 = vpop.f32.mrf.mxu0
        %v575 = vadd.f32 0.0, %v574
        %576 = vmatmul.bf16.gmra.mxu0 %v395
        %v577 = vpop.f32.mrf.mxu0
        %v578 = vadd.f32 0.0, %v577
        %v579 = vpop.f32.mrf.mxu0
        %v580 = vadd.f32 0.0, %v579
        %581 = vdwg.mxu0
        %v582 = vmax.f32 %v414, %v503
        %583 = vmax.xlane.f32.xlu0 %v582
        %v584 = vpop.xlane.xlu0 %583
        %v585 = vmax.f32 %v416, %v505
        %586 = vmax.xlane.f32.xlu0 %v585
        %v587 = vpop.xlane.xlu0 %586
        %v588 = vmax.f32 %v419, %v508
        %589 = vmax.xlane.f32.xlu0 %v588
        %v590 = vpop.xlane.xlu0 %589
        %v591 = vmax.f32 %v421, %v510
        %592 = vmax.xlane.f32.xlu0 %v591
        %v593 = vpop.xlane.xlu0 %592
        %v594 = vmax.f32 %v424, %v513
        %595 = vmax.xlane.f32.xlu0 %v594
        %v596 = vpop.xlane.xlu0 %595
        %v597 = vmax.f32 %v426, %v515
        %598 = vmax.xlane.f32.xlu0 %v597
        %v599 = vpop.xlane.xlu0 %598
        %v600 = vmax.f32 %v429, %v518
        %601 = vmax.xlane.f32.xlu0 %v600
        %v602 = vpop.xlane.xlu0 %601
        %v603 = vmax.f32 %v431, %v520
        %604 = vmax.xlane.f32.xlu0 %v603
        %v605 = vpop.xlane.xlu0 %604
        %v606 = vmax.f32 %v434, %v523
        %607 = vmax.xlane.f32.xlu0 %v606
        %v608 = vpop.xlane.xlu0 %607
        %v609 = vmax.f32 %v436, %v525
        %610 = vmax.xlane.f32.xlu0 %v609
        %v611 = vpop.xlane.xlu0 %610
        %v612 = vmax.f32 %v439, %v528
        %613 = vmax.xlane.f32.xlu0 %v612
        %v614 = vpop.xlane.xlu0 %613
        %v615 = vmax.f32 %v441, %v530
        %616 = vmax.xlane.f32.xlu0 %v615
        %v617 = vpop.xlane.xlu0 %616
        %v618 = vmax.f32 %v444, %v533
        %619 = vmax.xlane.f32.xlu0 %v618
        %v620 = vpop.xlane.xlu0 %619
        %v621 = vmax.f32 %v446, %v535
        %622 = vmax.xlane.f32.xlu0 %v621
        %v623 = vpop.xlane.xlu0 %622
        %v624 = vmax.f32 %v449, %v538
        %625 = vmax.xlane.f32.xlu0 %v624
        %v626 = vpop.xlane.xlu0 %625
        %v627 = vmax.f32 %v451, %v540
        %628 = vmax.xlane.f32.xlu0 %v627
        %v629 = vpop.xlane.xlu0 %628
        %v630 = vmax.f32 %v454, %v543
        %631 = vmax.xlane.f32.xlu0 %v630
        %v632 = vpop.xlane.xlu0 %631
        %v633 = vmax.f32 %v456, %v545
        %634 = vmax.xlane.f32.xlu0 %v633
        %v635 = vpop.xlane.xlu0 %634
        %v636 = vmax.f32 %v459, %v548
        %637 = vmax.xlane.f32.xlu0 %v636
        %v638 = vpop.xlane.xlu0 %637
        %v639 = vmax.f32 %v461, %v550
        %640 = vmax.xlane.f32.xlu0 %v639
        %v641 = vpop.xlane.xlu0 %640
        %v642 = vmax.f32 %v464, %v553
        %643 = vmax.xlane.f32.xlu0 %v642
        %v644 = vpop.xlane.xlu0 %643
        %v645 = vmax.f32 %v466, %v555
        %646 = vmax.xlane.f32.xlu0 %v645
        %v647 = vpop.xlane.xlu0 %646
        %v648 = vmax.f32 %v469, %v558
        %649 = vmax.xlane.f32.xlu0 %v648
        %v650 = vpop.xlane.xlu0 %649
        %v651 = vmax.f32 %v471, %v560
        %652 = vmax.xlane.f32.xlu0 %v651
        %v653 = vpop.xlane.xlu0 %652
        %v654 = vmax.f32 %v474, %v563
        %655 = vmax.xlane.f32.xlu0 %v654
        %v656 = vpop.xlane.xlu0 %655
        %v657 = vmax.f32 %v476, %v565
        %658 = vmax.xlane.f32.xlu0 %v657
        %v659 = vpop.xlane.xlu0 %658
        %v660 = vmax.f32 %v479, %v568
        %661 = vmax.xlane.f32.xlu0 %v660
        %v662 = vpop.xlane.xlu0 %661
        %v663 = vmax.f32 %v481, %v570
        %664 = vmax.xlane.f32.xlu0 %v663
        %v665 = vpop.xlane.xlu0 %664
        %v666 = vmax.f32 %v484, %v573
        %667 = vmax.xlane.f32.xlu0 %v666
        %v668 = vpop.xlane.xlu0 %667
        %v669 = vmax.f32 %v486, %v575
        %670 = vmax.xlane.f32.xlu0 %v669
        %v671 = vpop.xlane.xlu0 %670
        %v672 = vmax.f32 %v489, %v578
        %673 = vmax.xlane.f32.xlu0 %v672
        %v674 = vpop.xlane.xlu0 %673
        %v675 = vmax.f32 %v491, %v580
        %676 = vmax.xlane.f32.xlu0 %v675
        %v677 = vpop.xlane.xlu0 %676
        %v678 = vsub.f32 %v414, %v584
        %v679 = vsub.f32 %v503, %v584
        %v680 = vsub.f32 %v416, %v587
        %v681 = vsub.f32 %v505, %v587
        %v682 = vsub.f32 %v419, %v590
        %v683 = vsub.f32 %v508, %v590
        %v684 = vsub.f32 %v421, %v593
        %v685 = vsub.f32 %v510, %v593
        %v686 = vsub.f32 %v424, %v596
        %v687 = vsub.f32 %v513, %v596
        %v688 = vsub.f32 %v426, %v599
        %v689 = vsub.f32 %v515, %v599
        %v690 = vsub.f32 %v429, %v602
        %v691 = vsub.f32 %v518, %v602
        %v692 = vsub.f32 %v431, %v605
        %v693 = vsub.f32 %v520, %v605
        %v694 = vsub.f32 %v434, %v608
        %v695 = vsub.f32 %v523, %v608
        %v696 = vsub.f32 %v436, %v611
        %v697 = vsub.f32 %v525, %v611
        %v698 = vsub.f32 %v439, %v614
        %v699 = vsub.f32 %v528, %v614
        %v700 = vsub.f32 %v441, %v617
        %v701 = vsub.f32 %v530, %v617
        %v702 = vsub.f32 %v444, %v620
        %v703 = vsub.f32 %v533, %v620
        %v704 = vsub.f32 %v446, %v623
        %v705 = vsub.f32 %v535, %v623
        %v706 = vsub.f32 %v449, %v626
        %v707 = vsub.f32 %v538, %v626
        %v708 = vsub.f32 %v451, %v629
        %v709 = vsub.f32 %v540, %v629
        %v710 = vsub.f32 %v454, %v632
        %v711 = vsub.f32 %v543, %v632
        %v712 = vsub.f32 %v456, %v635
        %v713 = vsub.f32 %v545, %v635
        %v714 = vsub.f32 %v459, %v638
        %v715 = vsub.f32 %v548, %v638
        %v716 = vsub.f32 %v461, %v641
        %v717 = vsub.f32 %v550, %v641
        %v718 = vsub.f32 %v464, %v644
        %v719 = vsub.f32 %v553, %v644
        %v720 = vsub.f32 %v466, %v647
        %v721 = vsub.f32 %v555, %v647
        %v722 = vsub.f32 %v469, %v650
        %v723 = vsub.f32 %v558, %v650
        %v724 = vsub.f32 %v471, %v653
        %v725 = vsub.f32 %v560, %v653
        %v726 = vsub.f32 %v474, %v656
        %v727 = vsub.f32 %v563, %v656
        %v728 = vsub.f32 %v476, %v659
        %v729 = vsub.f32 %v565, %v659
        %v730 = vsub.f32 %v479, %v662
        %v731 = vsub.f32 %v568, %v662
        %v732 = vsub.f32 %v481, %v665
        %v733 = vsub.f32 %v570, %v665
        %v734 = vsub.f32 %v484, %v668
        %v735 = vsub.f32 %v573, %v668
        %v736 = vsub.f32 %v486, %v671
        %v737 = vsub.f32 %v575, %v671
        %v738 = vsub.f32 %v489, %v674
        %v739 = vsub.f32 %v578, %v674
        %v740 = vsub.f32 %v491, %v677
        %v741 = vsub.f32 %v580, %v677
        %v742 = vpack.c.bf16 %v679, %v678
        %v743 = vpack.c.bf16 %v681, %v680
        %v744 = vpack.c.bf16 %v683, %v682
        %v745 = vpack.c.bf16 %v685, %v684
        %v746 = vpack.c.bf16 %v687, %v686
        %v747 = vpack.c.bf16 %v689, %v688
        %v748 = vpack.c.bf16 %v691, %v690
        %v749 = vpack.c.bf16 %v693, %v692
        %v750 = vpack.c.bf16 %v695, %v694
        %v751 = vpack.c.bf16 %v697, %v696
        %v752 = vpack.c.bf16 %v699, %v698
        %v753 = vpack.c.bf16 %v701, %v700
        %v754 = vpack.c.bf16 %v703, %v702
        %v755 = vpack.c.bf16 %v705, %v704
        %v756 = vpack.c.bf16 %v707, %v706
        %v757 = vpack.c.bf16 %v709, %v708
        %v758 = vpack.c.bf16 %v711, %v710
        %v759 = vpack.c.bf16 %v713, %v712
        %v760 = vpack.c.bf16 %v715, %v714
        %v761 = vpack.c.bf16 %v717, %v716
        %v762 = vpack.c.bf16 %v719, %v718
        %v763 = vpack.c.bf16 %v721, %v720
        %v764 = vpack.c.bf16 %v723, %v722
        %v765 = vpack.c.bf16 %v725, %v724
        %v766 = vpack.c.bf16 %v727, %v726
        %v767 = vpack.c.bf16 %v729, %v728
        %v768 = vpack.c.bf16 %v731, %v730
        %v769 = vpack.c.bf16 %v733, %v732
        %v770 = vpack.c.bf16 %v735, %v734
        %v771 = vpack.c.bf16 %v737, %v736
        %v772 = vpack.c.bf16 %v739, %v738
        %v773 = vpack.c.bf16 %v741, %v740
        %v774 = vunpack.c.l.bf16 %v742
        %v775 = vunpack.c.h.bf16 %v742
        %v776 = vunpack.c.l.bf16 %v743
        %v777 = vunpack.c.h.bf16 %v743
        %v778 = vunpack.c.l.bf16 %v744
        %v779 = vunpack.c.h.bf16 %v744
        %v780 = vunpack.c.l.bf16 %v745
        %v781 = vunpack.c.h.bf16 %v745
        %v782 = vunpack.c.l.bf16 %v746
        %v783 = vunpack.c.h.bf16 %v746
        %v784 = vunpack.c.l.bf16 %v747
        %v785 = vunpack.c.h.bf16 %v747
        %v786 = vunpack.c.l.bf16 %v748
        %v787 = vunpack.c.h.bf16 %v748
        %v788 = vunpack.c.l.bf16 %v749
        %v789 = vunpack.c.h.bf16 %v749
        %v790 = vunpack.c.l.bf16 %v750
        %v791 = vunpack.c.h.bf16 %v750
        %v792 = vunpack.c.l.bf16 %v751
        %v793 = vunpack.c.h.bf16 %v751
        %v794 = vunpack.c.l.bf16 %v752
        %v795 = vunpack.c.h.bf16 %v752
        %v796 = vunpack.c.l.bf16 %v753
        %v797 = vunpack.c.h.bf16 %v753
        %v798 = vunpack.c.l.bf16 %v754
        %v799 = vunpack.c.h.bf16 %v754
        %v800 = vunpack.c.l.bf16 %v755
        %v801 = vunpack.c.h.bf16 %v755
        %v802 = vunpack.c.l.bf16 %v756
        %v803 = vunpack.c.h.bf16 %v756
        %v804 = vunpack.c.l.bf16 %v757
        %v805 = vunpack.c.h.bf16 %v757
        %v806 = vunpack.c.l.bf16 %v758
        %v807 = vunpack.c.h.bf16 %v758
        %v808 = vunpack.c.l.bf16 %v759
        %v809 = vunpack.c.h.bf16 %v759
        %v810 = vunpack.c.l.bf16 %v760
        %v811 = vunpack.c.h.bf16 %v760
        %v812 = vunpack.c.l.bf16 %v761
        %v813 = vunpack.c.h.bf16 %v761
        %v814 = vunpack.c.l.bf16 %v762
        %v815 = vunpack.c.h.bf16 %v762
        %v816 = vunpack.c.l.bf16 %v763
        %v817 = vunpack.c.h.bf16 %v763
        %v818 = vunpack.c.l.bf16 %v764
        %v819 = vunpack.c.h.bf16 %v764
        %v820 = vunpack.c.l.bf16 %v765
        %v821 = vunpack.c.h.bf16 %v765
        %v822 = vunpack.c.l.bf16 %v766
        %v823 = vunpack.c.h.bf16 %v766
        %v824 = vunpack.c.l.bf16 %v767
        %v825 = vunpack.c.h.bf16 %v767
        %v826 = vunpack.c.l.bf16 %v768
        %v827 = vunpack.c.h.bf16 %v768
        %v828 = vunpack.c.l.bf16 %v769
        %v829 = vunpack.c.h.bf16 %v769
        %v830 = vunpack.c.l.bf16 %v770
        %v831 = vunpack.c.h.bf16 %v770
        %v832 = vunpack.c.l.bf16 %v771
        %v833 = vunpack.c.h.bf16 %v771
        %v834 = vunpack.c.l.bf16 %v772
        %v835 = vunpack.c.h.bf16 %v772
        %v836 = vunpack.c.l.bf16 %v773
        %v837 = vunpack.c.h.bf16 %v773
        %v838 = vmul.f32 %v774, 1.442695
        %v839 = vpow.pop %v838
        %v840 = vmul.f32 %v775, 1.442695
        %v841 = vpow.pop %v840
        %v842 = vmul.f32 %v776, 1.442695
        %v843 = vpow.pop %v842
        %v844 = vmul.f32 %v777, 1.442695
        %v845 = vpow.pop %v844
        %v846 = vmul.f32 %v778, 1.442695
        %v847 = vpow.pop %v846
        %v848 = vmul.f32 %v779, 1.442695
        %v849 = vpow.pop %v848
        %v850 = vmul.f32 %v780, 1.442695
        %v851 = vpow.pop %v850
        %v852 = vmul.f32 %v781, 1.442695
        %v853 = vpow.pop %v852
        %v854 = vmul.f32 %v782, 1.442695
        %v855 = vpow.pop %v854
        %v856 = vmul.f32 %v783, 1.442695
        %v857 = vpow.pop %v856
        %v858 = vmul.f32 %v784, 1.442695
        %v859 = vpow.pop %v858
        %v860 = vmul.f32 %v785, 1.442695
        %v861 = vpow.pop %v860
        %v862 = vmul.f32 %v786, 1.442695
        %v863 = vpow.pop %v862
        %v864 = vmul.f32 %v787, 1.442695
        %v865 = vpow.pop %v864
        %v866 = vmul.f32 %v788, 1.442695
        %v867 = vpow.pop %v866
        %v868 = vmul.f32 %v789, 1.442695
        %v869 = vpow.pop %v868
        %v870 = vmul.f32 %v790, 1.442695
        %v871 = vpow.pop %v870
        %v872 = vmul.f32 %v791, 1.442695
        %v873 = vpow.pop %v872
        %v874 = vmul.f32 %v792, 1.442695
        %v875 = vpow.pop %v874
        %v876 = vmul.f32 %v793, 1.442695
        %v877 = vpow.pop %v876
        %v878 = vmul.f32 %v794, 1.442695
        %v879 = vpow.pop %v878
        %v880 = vmul.f32 %v795, 1.442695
        %v881 = vpow.pop %v880
        %v882 = vmul.f32 %v796, 1.442695
        %v883 = vpow.pop %v882
        %v884 = vmul.f32 %v797, 1.442695
        %v885 = vpow.pop %v884
        %v886 = vmul.f32 %v798, 1.442695
        %v887 = vpow.pop %v886
        %v888 = vmul.f32 %v799, 1.442695
        %v889 = vpow.pop %v888
        %v890 = vmul.f32 %v800, 1.442695
        %v891 = vpow.pop %v890
        %v892 = vmul.f32 %v801, 1.442695
        %v893 = vpow.pop %v892
        %v894 = vmul.f32 %v802, 1.442695
        %v895 = vpow.pop %v894
        %v896 = vmul.f32 %v803, 1.442695
        %v897 = vpow.pop %v896
        %v898 = vmul.f32 %v804, 1.442695
        %v899 = vpow.pop %v898
        %v900 = vmul.f32 %v805, 1.442695
        %v901 = vpow.pop %v900
        %v902 = vmul.f32 %v806, 1.442695
        %v903 = vpow.pop %v902
        %v904 = vmul.f32 %v807, 1.442695
        %v905 = vpow.pop %v904
        %v906 = vmul.f32 %v808, 1.442695
        %v907 = vpow.pop %v906
        %v908 = vmul.f32 %v809, 1.442695
        %v909 = vpow.pop %v908
        %v910 = vmul.f32 %v810, 1.442695
        %v911 = vpow.pop %v910
        %v912 = vmul.f32 %v811, 1.442695
        %v913 = vpow.pop %v912
        %v914 = vmul.f32 %v812, 1.442695
        %v915 = vpow.pop %v914
        %v916 = vmul.f32 %v813, 1.442695
        %v917 = vpow.pop %v916
        %v918 = vmul.f32 %v814, 1.442695
        %v919 = vpow.pop %v918
        %v920 = vmul.f32 %v815, 1.442695
        %v921 = vpow.pop %v920
        %v922 = vmul.f32 %v816, 1.442695
        %v923 = vpow.pop %v922
        %v924 = vmul.f32 %v817, 1.442695
        %v925 = vpow.pop %v924
        %v926 = vmul.f32 %v818, 1.442695
        %v927 = vpow.pop %v926
        %v928 = vmul.f32 %v819, 1.442695
        %v929 = vpow.pop %v928
        %v930 = vmul.f32 %v820, 1.442695
        %v931 = vpow.pop %v930
        %v932 = vmul.f32 %v821, 1.442695
        %v933 = vpow.pop %v932
        %v934 = vmul.f32 %v822, 1.442695
        %v935 = vpow.pop %v934
        %v936 = vmul.f32 %v823, 1.442695
        %v937 = vpow.pop %v936
        %v938 = vmul.f32 %v824, 1.442695
        %v939 = vpow.pop %v938
        %v940 = vmul.f32 %v825, 1.442695
        %v941 = vpow.pop %v940
        %v942 = vmul.f32 %v826, 1.442695
        %v943 = vpow.pop %v942
        %v944 = vmul.f32 %v827, 1.442695
        %v945 = vpow.pop %v944
        %v946 = vmul.f32 %v828, 1.442695
        %v947 = vpow.pop %v946
        %v948 = vmul.f32 %v829, 1.442695
        %v949 = vpow.pop %v948
        %v950 = vmul.f32 %v830, 1.442695
        %v951 = vpow.pop %v950
        %v952 = vmul.f32 %v831, 1.442695
        %v953 = vpow.pop %v952
        %v954 = vmul.f32 %v832, 1.442695
        %v955 = vpow.pop %v954
        %v956 = vmul.f32 %v833, 1.442695
        %v957 = vpow.pop %v956
        %v958 = vmul.f32 %v834, 1.442695
        %v959 = vpow.pop %v958
        %v960 = vmul.f32 %v835, 1.442695
        %v961 = vpow.pop %v960
        %v962 = vmul.f32 %v836, 1.442695
        %v963 = vpow.pop %v962
        %v964 = vmul.f32 %v837, 1.442695
        %v965 = vpow.pop %v964
        %v966 = vpack.c.bf16 %v841, %v839
        %v967 = vpack.c.bf16 %v845, %v843
        %v968 = vpack.c.bf16 %v849, %v847
        %v969 = vpack.c.bf16 %v853, %v851
        %v970 = vpack.c.bf16 %v857, %v855
        %v971 = vpack.c.bf16 %v861, %v859
        %v972 = vpack.c.bf16 %v865, %v863
        %v973 = vpack.c.bf16 %v869, %v867
        %v974 = vpack.c.bf16 %v873, %v871
        %v975 = vpack.c.bf16 %v877, %v875
        %v976 = vpack.c.bf16 %v881, %v879
        %v977 = vpack.c.bf16 %v885, %v883
        %v978 = vpack.c.bf16 %v889, %v887
        %v979 = vpack.c.bf16 %v893, %v891
        %v980 = vpack.c.bf16 %v897, %v895
        %v981 = vpack.c.bf16 %v901, %v899
        %v982 = vpack.c.bf16 %v905, %v903
        %v983 = vpack.c.bf16 %v909, %v907
        %v984 = vpack.c.bf16 %v913, %v911
        %v985 = vpack.c.bf16 %v917, %v915
        %v986 = vpack.c.bf16 %v921, %v919
        %v987 = vpack.c.bf16 %v925, %v923
        %v988 = vpack.c.bf16 %v929, %v927
        %v989 = vpack.c.bf16 %v933, %v931
        %v990 = vpack.c.bf16 %v937, %v935
        %v991 = vpack.c.bf16 %v941, %v939
        %v992 = vpack.c.bf16 %v945, %v943
        %v993 = vpack.c.bf16 %v949, %v947
        %v994 = vpack.c.bf16 %v953, %v951
        %v995 = vpack.c.bf16 %v957, %v955
        %v996 = vpack.c.bf16 %v961, %v959
        %v997 = vpack.c.bf16 %v965, %v963
        %v998 = vunpack.c.l.bf16 %v966
        %v999 = vunpack.c.h.bf16 %v966
        %v1000 = vunpack.c.l.bf16 %v967
        %v1001 = vunpack.c.h.bf16 %v967
        %v1002 = vunpack.c.l.bf16 %v968
        %v1003 = vunpack.c.h.bf16 %v968
        %v1004 = vunpack.c.l.bf16 %v969
        %v1005 = vunpack.c.h.bf16 %v969
        %v1006 = vunpack.c.l.bf16 %v970
        %v1007 = vunpack.c.h.bf16 %v970
        %v1008 = vunpack.c.l.bf16 %v971
        %v1009 = vunpack.c.h.bf16 %v971
        %v1010 = vunpack.c.l.bf16 %v972
        %v1011 = vunpack.c.h.bf16 %v972
        %v1012 = vunpack.c.l.bf16 %v973
        %v1013 = vunpack.c.h.bf16 %v973
        %v1014 = vunpack.c.l.bf16 %v974
        %v1015 = vunpack.c.h.bf16 %v974
        %v1016 = vunpack.c.l.bf16 %v975
        %v1017 = vunpack.c.h.bf16 %v975
        %v1018 = vunpack.c.l.bf16 %v976
        %v1019 = vunpack.c.h.bf16 %v976
        %v1020 = vunpack.c.l.bf16 %v977
        %v1021 = vunpack.c.h.bf16 %v977
        %v1022 = vunpack.c.l.bf16 %v978
        %v1023 = vunpack.c.h.bf16 %v978
        %v1024 = vunpack.c.l.bf16 %v979
        %v1025 = vunpack.c.h.bf16 %v979
        %v1026 = vunpack.c.l.bf16 %v980
        %v1027 = vunpack.c.h.bf16 %v980
        %v1028 = vunpack.c.l.bf16 %v981
        %v1029 = vunpack.c.h.bf16 %v981
        %v1030 = vunpack.c.l.bf16 %v982
        %v1031 = vunpack.c.h.bf16 %v982
        %v1032 = vunpack.c.l.bf16 %v983
        %v1033 = vunpack.c.h.bf16 %v983
        %v1034 = vunpack.c.l.bf16 %v984
        %v1035 = vunpack.c.h.bf16 %v984
        %v1036 = vunpack.c.l.bf16 %v985
        %v1037 = vunpack.c.h.bf16 %v985
        %v1038 = vunpack.c.l.bf16 %v986
        %v1039 = vunpack.c.h.bf16 %v986
        %v1040 = vunpack.c.l.bf16 %v987
        %v1041 = vunpack.c.h.bf16 %v987
        %v1042 = vunpack.c.l.bf16 %v988
        %v1043 = vunpack.c.h.bf16 %v988
        %v1044 = vunpack.c.l.bf16 %v989
        %v1045 = vunpack.c.h.bf16 %v989
        %v1046 = vunpack.c.l.bf16 %v990
        %v1047 = vunpack.c.h.bf16 %v990
        %v1048 = vunpack.c.l.bf16 %v991
        %v1049 = vunpack.c.h.bf16 %v991
        %v1050 = vunpack.c.l.bf16 %v992
        %v1051 = vunpack.c.h.bf16 %v992
        %v1052 = vunpack.c.l.bf16 %v993
        %v1053 = vunpack.c.h.bf16 %v993
        %v1054 = vunpack.c.l.bf16 %v994
        %v1055 = vunpack.c.h.bf16 %v994
        %v1056 = vunpack.c.l.bf16 %v995
        %v1057 = vunpack.c.h.bf16 %v995
        %v1058 = vunpack.c.l.bf16 %v996
        %v1059 = vunpack.c.h.bf16 %v996
        %v1060 = vunpack.c.l.bf16 %v997
        %v1061 = vunpack.c.h.bf16 %v997
        %v1062 = vadd.f32 %v998, %v999
        %1063 = vadd.xlane.f32.xlu0 %v1062
        %v1064 = vpop.xlane.xlu0 %1063
        %v1065 = vadd.f32 %v1000, %v1001
        %1066 = vadd.xlane.f32.xlu0 %v1065
        %v1067 = vpop.xlane.xlu0 %1066
        %v1068 = vadd.f32 %v1002, %v1003
        %1069 = vadd.xlane.f32.xlu0 %v1068
        %v1070 = vpop.xlane.xlu0 %1069
        %v1071 = vadd.f32 %v1004, %v1005
        %1072 = vadd.xlane.f32.xlu0 %v1071
        %v1073 = vpop.xlane.xlu0 %1072
        %v1074 = vadd.f32 %v1006, %v1007
        %1075 = vadd.xlane.f32.xlu0 %v1074
        %v1076 = vpop.xlane.xlu0 %1075
        %v1077 = vadd.f32 %v1008, %v1009
        %1078 = vadd.xlane.f32.xlu0 %v1077
        %v1079 = vpop.xlane.xlu0 %1078
        %v1080 = vadd.f32 %v1010, %v1011
        %1081 = vadd.xlane.f32.xlu0 %v1080
        %v1082 = vpop.xlane.xlu0 %1081
        %v1083 = vadd.f32 %v1012, %v1013
        %1084 = vadd.xlane.f32.xlu0 %v1083
        %v1085 = vpop.xlane.xlu0 %1084
        %v1086 = vadd.f32 %v1014, %v1015
        %1087 = vadd.xlane.f32.xlu0 %v1086
        %v1088 = vpop.xlane.xlu0 %1087
        %v1089 = vadd.f32 %v1016, %v1017
        %1090 = vadd.xlane.f32.xlu0 %v1089
        %v1091 = vpop.xlane.xlu0 %1090
        %v1092 = vadd.f32 %v1018, %v1019
        %1093 = vadd.xlane.f32.xlu0 %v1092
        %v1094 = vpop.xlane.xlu0 %1093
        %v1095 = vadd.f32 %v1020, %v1021
        %1096 = vadd.xlane.f32.xlu0 %v1095
        %v1097 = vpop.xlane.xlu0 %1096
        %v1098 = vadd.f32 %v1022, %v1023
        %1099 = vadd.xlane.f32.xlu0 %v1098
        %v1100 = vpop.xlane.xlu0 %1099
        %v1101 = vadd.f32 %v1024, %v1025
        %1102 = vadd.xlane.f32.xlu0 %v1101
        %v1103 = vpop.xlane.xlu0 %1102
        %v1104 = vadd.f32 %v1026, %v1027
        %1105 = vadd.xlane.f32.xlu0 %v1104
        %v1106 = vpop.xlane.xlu0 %1105
        %v1107 = vadd.f32 %v1028, %v1029
        %1108 = vadd.xlane.f32.xlu0 %v1107
        %v1109 = vpop.xlane.xlu0 %1108
        %v1110 = vadd.f32 %v1030, %v1031
        %1111 = vadd.xlane.f32.xlu0 %v1110
        %v1112 = vpop.xlane.xlu0 %1111
        %v1113 = vadd.f32 %v1032, %v1033
        %1114 = vadd.xlane.f32.xlu0 %v1113
        %v1115 = vpop.xlane.xlu0 %1114
        %v1116 = vadd.f32 %v1034, %v1035
        %1117 = vadd.xlane.f32.xlu0 %v1116
        %v1118 = vpop.xlane.xlu0 %1117
        %v1119 = vadd.f32 %v1036, %v1037
        %1120 = vadd.xlane.f32.xlu0 %v1119
        %v1121 = vpop.xlane.xlu0 %1120
        %v1122 = vadd.f32 %v1038, %v1039
        %1123 = vadd.xlane.f32.xlu0 %v1122
        %v1124 = vpop.xlane.xlu0 %1123
        %v1125 = vadd.f32 %v1040, %v1041
        %1126 = vadd.xlane.f32.xlu0 %v1125
        %v1127 = vpop.xlane.xlu0 %1126
        %v1128 = vadd.f32 %v1042, %v1043
        %1129 = vadd.xlane.f32.xlu0 %v1128
        %v1130 = vpop.xlane.xlu0 %1129
        %v1131 = vadd.f32 %v1044, %v1045
        %1132 = vadd.xlane.f32.xlu0 %v1131
        %v1133 = vpop.xlane.xlu0 %1132
        %v1134 = vadd.f32 %v1046, %v1047
        %1135 = vadd.xlane.f32.xlu0 %v1134
        %v1136 = vpop.xlane.xlu0 %1135
        %v1137 = vadd.f32 %v1048, %v1049
        %1138 = vadd.xlane.f32.xlu0 %v1137
        %v1139 = vpop.xlane.xlu0 %1138
        %v1140 = vadd.f32 %v1050, %v1051
        %1141 = vadd.xlane.f32.xlu0 %v1140
        %v1142 = vpop.xlane.xlu0 %1141
        %v1143 = vadd.f32 %v1052, %v1053
        %1144 = vadd.xlane.f32.xlu0 %v1143
        %v1145 = vpop.xlane.xlu0 %1144
        %v1146 = vadd.f32 %v1054, %v1055
        %1147 = vadd.xlane.f32.xlu0 %v1146
        %v1148 = vpop.xlane.xlu0 %1147
        %v1149 = vadd.f32 %v1056, %v1057
        %1150 = vadd.xlane.f32.xlu0 %v1149
        %v1151 = vpop.xlane.xlu0 %1150
        %v1152 = vadd.f32 %v1058, %v1059
        %1153 = vadd.xlane.f32.xlu0 %v1152
        %v1154 = vpop.xlane.xlu0 %1153
        %v1155 = vadd.f32 %v1060, %v1061
        %1156 = vadd.xlane.f32.xlu0 %v1155
        %v1157 = vpop.xlane.xlu0 %1156
        %v1158 = vrcp.pop %v1064
        %v1159 = vrcp.pop %v1067
        %v1160 = vrcp.pop %v1070
        %v1161 = vrcp.pop %v1073
        %v1162 = vrcp.pop %v1076
        %v1163 = vrcp.pop %v1079
        %v1164 = vrcp.pop %v1082
        %v1165 = vrcp.pop %v1085
        %v1166 = vrcp.pop %v1088
        %v1167 = vrcp.pop %v1091
        %v1168 = vrcp.pop %v1094
        %v1169 = vrcp.pop %v1097
        %v1170 = vrcp.pop %v1100
        %v1171 = vrcp.pop %v1103
        %v1172 = vrcp.pop %v1106
        %v1173 = vrcp.pop %v1109
        %v1174 = vrcp.pop %v1112
        %v1175 = vrcp.pop %v1115
        %v1176 = vrcp.pop %v1118
        %v1177 = vrcp.pop %v1121
        %v1178 = vrcp.pop %v1124
        %v1179 = vrcp.pop %v1127
        %v1180 = vrcp.pop %v1130
        %v1181 = vrcp.pop %v1133
        %v1182 = vrcp.pop %v1136
        %v1183 = vrcp.pop %v1139
        %v1184 = vrcp.pop %v1142
        %v1185 = vrcp.pop %v1145
        %v1186 = vrcp.pop %v1148
        %v1187 = vrcp.pop %v1151
        %v1188 = vrcp.pop %v1154
        %v1189 = vrcp.pop %v1157
        %v1190 = vpack.c.bf16 %v1158, %v1158
        %v1191 = vpack.c.bf16 %v1159, %v1159
        %v1192 = vpack.c.bf16 %v1160, %v1160
        %v1193 = vpack.c.bf16 %v1161, %v1161
        %v1194 = vpack.c.bf16 %v1162, %v1162
        %v1195 = vpack.c.bf16 %v1163, %v1163
        %v1196 = vpack.c.bf16 %v1164, %v1164
        %v1197 = vpack.c.bf16 %v1165, %v1165
        %v1198 = vpack.c.bf16 %v1166, %v1166
        %v1199 = vpack.c.bf16 %v1167, %v1167
        %v1200 = vpack.c.bf16 %v1168, %v1168
        %v1201 = vpack.c.bf16 %v1169, %v1169
        %v1202 = vpack.c.bf16 %v1170, %v1170
        %v1203 = vpack.c.bf16 %v1171, %v1171
        %v1204 = vpack.c.bf16 %v1172, %v1172
        %v1205 = vpack.c.bf16 %v1173, %v1173
        %v1206 = vpack.c.bf16 %v1174, %v1174
        %v1207 = vpack.c.bf16 %v1175, %v1175
        %v1208 = vpack.c.bf16 %v1176, %v1176
        %v1209 = vpack.c.bf16 %v1177, %v1177
        %v1210 = vpack.c.bf16 %v1178, %v1178
        %v1211 = vpack.c.bf16 %v1179, %v1179
        %v1212 = vpack.c.bf16 %v1180, %v1180
        %v1213 = vpack.c.bf16 %v1181, %v1181
        %v1214 = vpack.c.bf16 %v1182, %v1182
        %v1215 = vpack.c.bf16 %v1183, %v1183
        %v1216 = vpack.c.bf16 %v1184, %v1184
        %v1217 = vpack.c.bf16 %v1185, %v1185
        %v1218 = vpack.c.bf16 %v1186, %v1186
        %v1219 = vpack.c.bf16 %v1187, %v1187
        %v1220 = vpack.c.bf16 %v1188, %v1188
        %v1221 = vpack.c.bf16 %v1189, %v1189
        %v1222 = vunpack.c.l.bf16 %v1190
        %v1223 = vunpack.c.l.bf16 %v1191
        %v1224 = vunpack.c.l.bf16 %v1192
        %v1225 = vunpack.c.l.bf16 %v1193
        %v1226 = vunpack.c.l.bf16 %v1194
        %v1227 = vunpack.c.l.bf16 %v1195
        %v1228 = vunpack.c.l.bf16 %v1196
        %v1229 = vunpack.c.l.bf16 %v1197
        %v1230 = vunpack.c.l.bf16 %v1198
        %v1231 = vunpack.c.l.bf16 %v1199
        %v1232 = vunpack.c.l.bf16 %v1200
        %v1233 = vunpack.c.l.bf16 %v1201
        %v1234 = vunpack.c.l.bf16 %v1202
        %v1235 = vunpack.c.l.bf16 %v1203
        %v1236 = vunpack.c.l.bf16 %v1204
        %v1237 = vunpack.c.l.bf16 %v1205
        %v1238 = vunpack.c.l.bf16 %v1206
        %v1239 = vunpack.c.l.bf16 %v1207
        %v1240 = vunpack.c.l.bf16 %v1208
        %v1241 = vunpack.c.l.bf16 %v1209
        %v1242 = vunpack.c.l.bf16 %v1210
        %v1243 = vunpack.c.l.bf16 %v1211
        %v1244 = vunpack.c.l.bf16 %v1212
        %v1245 = vunpack.c.l.bf16 %v1213
        %v1246 = vunpack.c.l.bf16 %v1214
        %v1247 = vunpack.c.l.bf16 %v1215
        %v1248 = vunpack.c.l.bf16 %v1216
        %v1249 = vunpack.c.l.bf16 %v1217
        %v1250 = vunpack.c.l.bf16 %v1218
        %v1251 = vunpack.c.l.bf16 %v1219
        %v1252 = vunpack.c.l.bf16 %v1220
        %v1253 = vunpack.c.l.bf16 %v1221
        %v1254 = vmul.f32 %v998, %v1222
        %v1255 = vmul.f32 %v999, %v1222
        %v1256 = vmul.f32 %v1000, %v1223
        %v1257 = vmul.f32 %v1001, %v1223
        %v1258 = vmul.f32 %v1002, %v1224
        %v1259 = vmul.f32 %v1003, %v1224
        %v1260 = vmul.f32 %v1004, %v1225
        %v1261 = vmul.f32 %v1005, %v1225
        %v1262 = vmul.f32 %v1006, %v1226
        %v1263 = vmul.f32 %v1007, %v1226
        %v1264 = vmul.f32 %v1008, %v1227
        %v1265 = vmul.f32 %v1009, %v1227
        %v1266 = vmul.f32 %v1010, %v1228
        %v1267 = vmul.f32 %v1011, %v1228
        %v1268 = vmul.f32 %v1012, %v1229
        %v1269 = vmul.f32 %v1013, %v1229
        %v1270 = vmul.f32 %v1014, %v1230
        %v1271 = vmul.f32 %v1015, %v1230
        %v1272 = vmul.f32 %v1016, %v1231
        %v1273 = vmul.f32 %v1017, %v1231
        %v1274 = vmul.f32 %v1018, %v1232
        %v1275 = vmul.f32 %v1019, %v1232
        %v1276 = vmul.f32 %v1020, %v1233
        %v1277 = vmul.f32 %v1021, %v1233
        %v1278 = vmul.f32 %v1022, %v1234
        %v1279 = vmul.f32 %v1023, %v1234
        %v1280 = vmul.f32 %v1024, %v1235
        %v1281 = vmul.f32 %v1025, %v1235
        %v1282 = vmul.f32 %v1026, %v1236
        %v1283 = vmul.f32 %v1027, %v1236
        %v1284 = vmul.f32 %v1028, %v1237
        %v1285 = vmul.f32 %v1029, %v1237
        %v1286 = vmul.f32 %v1030, %v1238
        %v1287 = vmul.f32 %v1031, %v1238
        %v1288 = vmul.f32 %v1032, %v1239
        %v1289 = vmul.f32 %v1033, %v1239
        %v1290 = vmul.f32 %v1034, %v1240
        %v1291 = vmul.f32 %v1035, %v1240
        %v1292 = vmul.f32 %v1036, %v1241
        %v1293 = vmul.f32 %v1037, %v1241
        %v1294 = vmul.f32 %v1038, %v1242
        %v1295 = vmul.f32 %v1039, %v1242
        %v1296 = vmul.f32 %v1040, %v1243
        %v1297 = vmul.f32 %v1041, %v1243
        %v1298 = vmul.f32 %v1042, %v1244
        %v1299 = vmul.f32 %v1043, %v1244
        %v1300 = vmul.f32 %v1044, %v1245
        %v1301 = vmul.f32 %v1045, %v1245
        %v1302 = vmul.f32 %v1046, %v1246
        %v1303 = vmul.f32 %v1047, %v1246
        %v1304 = vmul.f32 %v1048, %v1247
        %v1305 = vmul.f32 %v1049, %v1247
        %v1306 = vmul.f32 %v1050, %v1248
        %v1307 = vmul.f32 %v1051, %v1248
        %v1308 = vmul.f32 %v1052, %v1249
        %v1309 = vmul.f32 %v1053, %v1249
        %v1310 = vmul.f32 %v1054, %v1250
        %v1311 = vmul.f32 %v1055, %v1250
        %v1312 = vmul.f32 %v1056, %v1251
        %v1313 = vmul.f32 %v1057, %v1251
        %v1314 = vmul.f32 %v1058, %v1252
        %v1315 = vmul.f32 %v1059, %v1252
        %v1316 = vmul.f32 %v1060, %v1253
        %v1317 = vmul.f32 %v1061, %v1253
        %v1318 = vpack.c.bf16 %v1256, %v1254
        %v1319 = vpack.c.bf16 %v1257, %v1255
        %v1320 = vpack.c.bf16 %v1260, %v1258
        %v1321 = vpack.c.bf16 %v1261, %v1259
        %v1322 = vpack.c.bf16 %v1264, %v1262
        %v1323 = vpack.c.bf16 %v1265, %v1263
        %v1324 = vpack.c.bf16 %v1268, %v1266
        %v1325 = vpack.c.bf16 %v1269, %v1267
        %v1326 = vpack.c.bf16 %v1272, %v1270
        %v1327 = vpack.c.bf16 %v1273, %v1271
        %v1328 = vpack.c.bf16 %v1276, %v1274
        %v1329 = vpack.c.bf16 %v1277, %v1275
        %v1330 = vpack.c.bf16 %v1280, %v1278
        %v1331 = vpack.c.bf16 %v1281, %v1279
        %v1332 = vpack.c.bf16 %v1284, %v1282
        %v1333 = vpack.c.bf16 %v1285, %v1283
        %v1334 = vpack.c.bf16 %v1288, %v1286
        %v1335 = vpack.c.bf16 %v1289, %v1287
        %v1336 = vpack.c.bf16 %v1292, %v1290
        %v1337 = vpack.c.bf16 %v1293, %v1291
        %v1338 = vpack.c.bf16 %v1296, %v1294
        %v1339 = vpack.c.bf16 %v1297, %v1295
        %v1340 = vpack.c.bf16 %v1300, %v1298
        %v1341 = vpack.c.bf16 %v1301, %v1299
        %v1342 = vpack.c.bf16 %v1304, %v1302
        %v1343 = vpack.c.bf16 %v1305, %v1303
        %v1344 = vpack.c.bf16 %v1308, %v1306
        %v1345 = vpack.c.bf16 %v1309, %v1307
        %v1346 = vpack.c.bf16 %v1312, %v1310
        %v1347 = vpack.c.bf16 %v1313, %v1311
        %v1348 = vpack.c.bf16 %v1316, %v1314
        %v1349 = vpack.c.bf16 %v1317, %v1315
        %v1350 = vpack.c.bf16 %v297, %v294
        %v1351 = vpack.c.bf16 %v316, %v313
        %1352 = vmatpush.bf16.msra.mxu0 %v1332
        %1353 = vmatpush.bf16.msra.mxu0 %v1330
        %1354 = vmatpush.bf16.msra.mxu0 %v1328
        %1355 = vmatpush.bf16.msra.mxu0 %v1326
        %1356 = vmatpush.bf16.msra.mxu0 %v1324
        %1357 = vmatpush.bf16.msra.mxu0 %v1322
        %1358 = vmatpush.bf16.msra.mxu0 %v1320
        %1359 = vmatpush.bf16.msra.mxu0 %v1318
        %1360 = vmatmul.bf16.gmra.mxu0 %v1350
        %v1361 = vpop.f32.mrf.mxu0
        %v1362 = vadd.f32 %v231, %v1361
        %v1363 = vpop.f32.mrf.mxu0
        %v1364 = vadd.f32 %v233, %v1363
        %1365 = vdwg.mxu0
        %1366 = vmatpush.bf16.msra.mxu0 %v1348
        %1367 = vmatpush.bf16.msra.mxu0 %v1346
        %1368 = vmatpush.bf16.msra.mxu0 %v1344
        %1369 = vmatpush.bf16.msra.mxu0 %v1342
        %1370 = vmatpush.bf16.msra.mxu0 %v1340
        %1371 = vmatpush.bf16.msra.mxu0 %v1338
        %1372 = vmatpush.bf16.msra.mxu0 %v1336
        %1373 = vmatpush.bf16.msra.mxu0 %v1334
        %1374 = vmatmul.bf16.gmra.mxu0 %v1351
        %v1375 = vpop.f32.mrf.mxu0
        %v1376 = vadd.f32 %v1362, %v1375
        %v1377 = vpop.f32.mrf.mxu0
        %v1378 = vadd.f32 %v1364, %v1377
        %1379 = vdwg.mxu0
        %1380 = vmatpush.bf16.msra.mxu0 %v1333
        %1381 = vmatpush.bf16.msra.mxu0 %v1331
        %1382 = vmatpush.bf16.msra.mxu0 %v1329
        %1383 = vmatpush.bf16.msra.mxu0 %v1327
        %1384 = vmatpush.bf16.msra.mxu0 %v1325
        %1385 = vmatpush.bf16.msra.mxu0 %v1323
        %1386 = vmatpush.bf16.msra.mxu0 %v1321
        %1387 = vmatpush.bf16.msra.mxu0 %v1319
        %1388 = vmatmul.bf16.gmra.mxu0 %v1350
        %v1389 = vpop.f32.mrf.mxu0
        %v1390 = vadd.f32 %v232, %v1389
        %v1391 = vpop.f32.mrf.mxu0
        %v1392 = vadd.f32 %v234, %v1391
        %1393 = vdwg.mxu0
        %1394 = vmatpush.bf16.msra.mxu0 %v1349
        %1395 = vmatpush.bf16.msra.mxu0 %v1347
        %1396 = vmatpush.bf16.msra.mxu0 %v1345
        %1397 = vmatpush.bf16.msra.mxu0 %v1343
        %1398 = vmatpush.bf16.msra.mxu0 %v1341
        %1399 = vmatpush.bf16.msra.mxu0 %v1339
        %1400 = vmatpush.bf16.msra.mxu0 %v1337
        %1401 = vmatpush.bf16.msra.mxu0 %v1335
        %1402 = vmatmul.bf16.gmra.mxu0 %v1351
        %v1403 = vpop.f32.mrf.mxu0
        %v1404 = vadd.f32 %v1390, %v1403
        %v1405 = vpop.f32.mrf.mxu0
        %v1406 = vadd.f32 %v1392, %v1405
        %1407 = vdwg.mxu0
        %1408 = vst [vmem:[%s229] sm:$0xff] %v1376
        %1409 = vst [vmem:[%s229 + $0x8] sm:$0xff] %v1404
        %1410 = vst [vmem:[%s229 + $0x10] sm:$0xff] %v1378
        %1411 = vst [vmem:[%s229 + $0x18] sm:$0xff] %v1406
        %s1412 = sand.u32 %s130, 1
        %s1413 = scalar_lea.sflag [#allocation4], %s1412
        %s1414 = sand.u32 %s130, 1
        %s1415 = smul.addr %s1414, 32
        %s1416 = scalar_lea.vmem [#allocation5], %s1415
        // Predicated region
        $region41: #{tpu_custom_call.1} parent=35 // pred_check
          %p1417 = pneg %p140
        $region42: #{tpu_custom_call.1} parent=35 // pred_check_branch
          %1419 = sbr.rel (%p1417) target = $region44
        $region43: #{tpu_custom_call.1} parent=35 // pred_region
          %1421 = vsyncadd %s1413, 0
          %s1422 = smul.addr %s25, 4
          %s1423 = smul.addr %s1422, 8
          %s1424 = scalar_lea.hbm %s4, %s1423
          %s1425 = sshll.u32 %s1416, 4
          %s1426 = int_to_ptr.vmem [resolvable:$true] %s1425
          %s1427 = sshll.u32 %s1424, 4
          %s1428 = int_to_ptr.hbm [resolvable:$true] %s1427
          %1433 = dma.vmem_to_hbm [thread:$0]  %s1426, 512, %s1428, %s1413, 256, 256, 16
        $region44: #{tpu_custom_call.1} parent=35 // pred_fallthru
          _
      $region36: #{tpu_custom_call.1} parent=5 // pred_fallthru
        _
      %p1434 = scmp.le.s32.totalorder 2, %s16
      // Predicated region
      $region45: #{tpu_custom_call.1} parent=5 // pred_check
        %p1435 = pneg %p1434
      $region46: #{tpu_custom_call.1} parent=5 // pred_check_branch
        %1437 = sbr.rel (%p1435) target = $region48
      $region47: #{tpu_custom_call.1} parent=5 // pred_region
        %s1438 = ssub.s32 %s16, 2
        // Predicated region
        $region49: #{tpu_custom_call.1} parent=47 // pred_check
          %p1439 = pneg %p146
        $region50: #{tpu_custom_call.1} parent=47 // pred_check_branch
          %1441 = sbr.rel (%p1439) target = $region52
        $region51: #{tpu_custom_call.1} parent=47 // pred_region
          %s1442 = sand.u32 %s131, 1
          %s1443 = scalar_lea.sflag [#allocation4], %s1442
          %s1444 = sand.u32 %s131, 1
          %s1445 = smul.addr %s1444, 32
          %s1446 = scalar_lea.vmem [#allocation5], %s1445
          %1448 = dma.done %s1443, 512
        $region52: #{tpu_custom_call.1} parent=47 // pred_fallthru
          _
      $region48: #{tpu_custom_call.1} parent=5 // pred_fallthru
        _
    $region6: #{tpu_custom_call.1} parent=1 // loop_footer
      %s20 = sadd.s32 1, %s16
    $region7: #{tpu_custom_call.1} parent=1 // loop_footer_branch
      %15 = sbr.rel target = $region3
    $region8: #{tpu_custom_call.1} parent=1 // loop_exit
      _
    %1449 = vsyncpa [#allocation3], 1
    %s1450 = scalar_lea.sflag [#allocation3], 1
    %1451 = vsyncpa %s1450, 1
    %1452 = vsyncpa [#allocation4], 1
    %s1453 = scalar_lea.sflag [#allocation4], 1
    %1454 = vsyncpa %s1453, 1

</llo_original>
